<compile_context>
chip_gen: v6e
topology: v6e:2x2x1
jax: 0.10.0
libtpu: 0.0.40
codegen_flags: <defaults>
</compile_context>

<pallas_src>
import functools

import jax
import jax.numpy as jnp
from jax import lax
from jax.experimental import pallas as pl
from jax.experimental.pallas import tpu as pltpu

BN_EPS = 1e-5


def _etfnet_kernel(x_ref, wconv_ref, bconv_ref, wfc_ref, bfc_ref,
                   gamma_ref, beta_ref, out_ref, acc_ref,
                   *, spatial, num_tiles, num_classes, num_features, out_width):
    """One S-tile of the fused backbone + BatchNorm1d forward.

    x_ref:      (N, C, TILE_S)   channels-first input tile (S on lanes)
    wconv_ref:  (C, F, 1)        1x1 conv weight
    bconv_ref:  (F, 1)           conv bias
    wfc_ref:    (F, K)           classifier weight
    bfc_ref:    (1, K)           classifier bias
    gamma_ref:  (1, F)           BatchNorm1d weight
    beta_ref:   (1, F)           BatchNorm1d bias
    out_ref:    (N, out_width)   packed [logits | feat | feat_bn | zero pad]
    acc_ref:    (N, F)           VMEM scratch: running spatial sum of relu(conv)
    """
    step = pl.program_id(0)

    @pl.when(step == 0)
    def _init():
        acc_ref[...] = jnp.zeros_like(acc_ref)

    x = x_ref[...]          # (N, C, TS)  f32, S on lanes
    w = wconv_ref[...]      # (C, F, 1)
    b = bconv_ref[...]      # (F, 1)

    n_ch = x.shape[1]
    # 1x1 conv as an unrolled C-channel VPU FMA:
    #   h[n, f, s] = sum_c x[n, c, s] * w[c, f]
    h = x[:, 0:1, :] * w[0:1]                      # (N,1,TS)*(1,F,1) -> (N,F,TS)
    for c in range(1, n_ch):                       # C is tiny (4): static unroll
        h = h + x[:, c:c + 1, :] * w[c:c + 1]
    h = jnp.maximum(h + b[None], 0.0)              # bias + ReLU, (N, F, TS)

    # Partial spatial sum (lane reduction), accumulated across S tiles.
    acc_ref[...] += jnp.sum(h, axis=2)

    @pl.when(step == num_tiles - 1)
    def _finalize():
        # Global average pool.
        feat = acc_ref[...] * (1.0 / float(spatial))               # (N, F)

        # Classifier head (tiny MXU matmul, exact f32).
        logits = jnp.dot(feat, wfc_ref[...],
                         precision=lax.Precision.HIGHEST,
                         preferred_element_type=jnp.float32) + bfc_ref[...]

        # BatchNorm1d with training-mode batch statistics, folded to one FMA.
        mu = jnp.mean(feat, axis=0, keepdims=True)                 # (1, F)
        var = jnp.mean(jnp.square(feat - mu), axis=0, keepdims=True)
        scale = lax.rsqrt(var + BN_EPS) * gamma_ref[...]           # EUP rsqrt
        shift = beta_ref[...] - mu * scale
        feat_bn = feat * scale + shift

        # Pack everything into one lane-dense (N, out_width) slab.
        k, f = num_classes, num_features
        out_ref[:, 0:k] = logits
        out_ref[:, k:k + f] = feat
        out_ref[:, k + f:k + 2 * f] = feat_bn
        if out_width > k + 2 * f:
            out_ref[:, k + 2 * f:] = jnp.zeros(
                (feat.shape[0], out_width - (k + 2 * f)), jnp.float32)


def etfnet_forward(x_nchw, params):
    """x_nchw: (N, C, H, W) float32.  Returns dict like the PyTorch module."""
    N, C, H, W = x_nchw.shape
    F = params['wconv'].shape[1]
    K = params['wfc'].shape[1]
    S = H * W

    # Zero-copy: keep channels-first, flatten the spatial dims onto the lane axis.
    x3 = x_nchw.reshape(N, C, S)
    wconv3 = params['wconv'][:, :, None]          # (C, F, 1)
    bconv_col = params['bconv'].reshape(F, 1)     # (F, 1)

    # Tile the spatial (lane) axis; at the toy S=256 this gives a 2-step grid
    # exercising the init/accumulate/finalize pipeline.  For larger S pick a
    # bigger multiple of 128 to amortize per-step overhead.
    tile_s = 128 if (S % 128 == 0) else S
    num_tiles = S // tile_s
    out_width = max(128, ((K + 2 * F + 127) // 128) * 128)

    kernel = functools.partial(
        _etfnet_kernel, spatial=S, num_tiles=num_tiles,
        num_classes=K, num_features=F, out_width=out_width)

    packed = pl.pallas_call(
        kernel,
        out_shape=jax.ShapeDtypeStruct((N, out_width), jnp.float32),
        grid_spec=pltpu.PrefetchScalarGridSpec(
            num_scalar_prefetch=0,
            grid=(num_tiles,),
            in_specs=[
                pl.BlockSpec((N, C, tile_s), lambda s: (0, 0, s)),   # x tile
                pl.BlockSpec((C, F, 1), lambda s: (0, 0, 0)),        # wconv
                pl.BlockSpec((F, 1), lambda s: (0, 0)),              # bconv
                pl.BlockSpec((F, K), lambda s: (0, 0)),              # wfc
                pl.BlockSpec((1, K), lambda s: (0, 0)),              # bfc
                pl.BlockSpec((1, F), lambda s: (0, 0)),              # gamma
                pl.BlockSpec((1, F), lambda s: (0, 0)),              # beta
            ],
            out_specs=pl.BlockSpec((N, out_width), lambda s: (0, 0)),
            scratch_shapes=[pltpu.VMEM((N, F), jnp.float32)],        # feat-sum acc
        ),
        # The S grid axis is a reduction (resident accumulator) -> "arbitrary".
        # TODO(synk): no independent axis to mark "parallel" for v7x's 2nd
        # TensorCore here -- BatchNorm couples the whole batch.
        compiler_params=pltpu.CompilerParams(
            dimension_semantics=("arbitrary",),
            vmem_limit_bytes=32 * 1024 * 1024),
    )(x3, wconv3, bconv_col, params['wfc'], params['bfc'],
      params['gamma'], params['beta'])

    logits = packed[:, :K]
    feat = packed[:, K:K + F]
    feat_bn = packed[:, K + F:K + 2 * F]
    return {'logits': logits, 'feat': feat, 'feat_bn': feat_bn}


def _reference_forward(x_nchw, params):
    """Pure-JAX f32 reference for correctness checking."""
    N, C, H, W = x_nchw.shape
    x3 = x_nchw.reshape(N, C, H * W)
    h = jnp.einsum('ncs,cf->nsf', x3, params['wconv'],
                   precision=lax.Precision.HIGHEST) + params['bconv']
    h = jnp.maximum(h, 0.0)
    feat = jnp.mean(h, axis=1)
    logits = jnp.dot(feat, params['wfc'],
                     precision=lax.Precision.HIGHEST) + params['bfc']
    mu = jnp.mean(feat, axis=0, keepdims=True)
    var = jnp.mean((feat - mu) ** 2, axis=0, keepdims=True)
    feat_bn = (feat - mu) / jnp.sqrt(var + BN_EPS) * params['gamma'] \
        + params['beta']
    return {'logits': logits, 'feat': feat, 'feat_bn': feat_bn}


if __name__ == "__main__":
    # Small shapes consistent with the module's forward:
    #   x: (N=8, C=4, H=16, W=16), num_features=32, num_classes=10
    N, C, H, W = 8, 4, 16, 16
    NUM_FEATURES = 32
    NUM_CLASSES = 10

    key = jax.random.PRNGKey(0)
    kx, kw1, kb1, kw2, kb2 = jax.random.split(key, 5)

    x = jax.random.normal(kx, (N, C, H, W), dtype=jnp.float32)

    params = {
        'wconv': jax.random.normal(kw1, (C, NUM_FEATURES), jnp.float32) * 0.1,
        'bconv': jax.random.normal(kb1, (1, NUM_FEATURES), jnp.float32) * 0.1,
        'wfc':   jax.random.normal(kw2, (NUM_FEATURES, NUM_CLASSES),
                                   jnp.float32) * 0.1,
        'bfc':   jax.random.normal(kb2, (1, NUM_CLASSES), jnp.float32) * 0.1,
        # BatchNorm1d defaults: weight=1, bias=0 (deterministic init)
        'gamma': jnp.ones((1, NUM_FEATURES), jnp.float32),
        'beta':  jnp.zeros((1, NUM_FEATURES), jnp.float32),
    }

    out = etfnet_forward(x, params)
    jax.block_until_ready(out)

    ref = _reference_forward(x, params)
    for name in ('logits', 'feat', 'feat_bn'):
        assert jnp.allclose(out[name], ref[name], atol=1e-4, rtol=1e-4), name

    print("KERNEL_OK")
</pallas_src>

<mosaic_0001>
module attributes {stable_mosaic.version = 11 : i64} {
  func.func @_etfnet_kernel(%arg0: i32, %arg1: memref<8x4x128xf32, #tpu.memory_space<vmem>>, %arg2: memref<4x32x1xf32, #tpu.memory_space<vmem>>, %arg3: memref<32x1xf32, #tpu.memory_space<vmem>>, %arg4: memref<32x10xf32, #tpu.memory_space<vmem>>, %arg5: memref<1x10xf32, #tpu.memory_space<vmem>>, %arg6: memref<1x32xf32, #tpu.memory_space<vmem>>, %arg7: memref<1x32xf32, #tpu.memory_space<vmem>>, %arg8: memref<8x128xf32, #tpu.memory_space<vmem>>, %arg9: memref<8x32xf32, #tpu.memory_space<vmem>>) attributes {dimension_semantics = [#tpu.dimension_semantics<arbitrary>], iteration_bounds = array<i64: 2>, scalar_prefetch = 0 : i64, scratch_operands = 1 : i64, tpu.core_type = #tpu.core_type<tc>, window_params = [{transform_indices = @transform_0, window_bounds = array<i64: 8, 4, 128>}, {pipeline_mode = #tpu.pipeline_mode<synchronous>, transform_indices = @transform_1, window_bounds = array<i64: 4, 32, 1>}, {pipeline_mode = #tpu.pipeline_mode<synchronous>, transform_indices = @transform_2, window_bounds = array<i64: 32, 1>}, {pipeline_mode = #tpu.pipeline_mode<synchronous>, transform_indices = @transform_3, window_bounds = array<i64: 32, 10>}, {pipeline_mode = #tpu.pipeline_mode<synchronous>, transform_indices = @transform_4, window_bounds = array<i64: 1, 10>}, {pipeline_mode = #tpu.pipeline_mode<synchronous>, transform_indices = @transform_5, window_bounds = array<i64: 1, 32>}, {pipeline_mode = #tpu.pipeline_mode<synchronous>, transform_indices = @transform_6, window_bounds = array<i64: 1, 32>}, {pipeline_mode = #tpu.pipeline_mode<synchronous>, transform_indices = @transform_7, window_bounds = array<i64: 8, 128>}]} {
    %c0_i32 = arith.constant 0 : i32
    %0 = arith.cmpi eq, %arg0, %c0_i32 : i32
    %1 = arith.extui %0 : i1 to i32
    %c0_i32_0 = arith.constant 0 : i32
    %2 = arith.cmpi ne, %1, %c0_i32_0 : i32
    scf.if %2 {
      %cst_14 = arith.constant 0.000000e+00 : f32
      %41 = vector.broadcast %cst_14 : f32 to vector<8x32xf32>
      %c0_15 = arith.constant 0 : index
      %c0_16 = arith.constant 0 : index
      %42 = vector.load %arg9[%c0_15, %c0_16] : memref<8x32xf32, #tpu.memory_space<vmem>>, vector<8x32xf32>
      tpu.vector_store %arg9[%c0_15, %c0_16], %41 {strides = array<i32>} : memref<8x32xf32, #tpu.memory_space<vmem>>, vector<8x32xf32>,
    } else {
    }
    %c0 = arith.constant 0 : index
    %c0_1 = arith.constant 0 : index
    %c0_2 = arith.constant 0 : index
    %3 = vector.load %arg1[%c0, %c0_1, %c0_2] : memref<8x4x128xf32, #tpu.memory_space<vmem>>, vector<8x4x128xf32>
    %c0_3 = arith.constant 0 : index
    %c0_4 = arith.constant 0 : index
    %c0_5 = arith.constant 0 : index
    %4 = vector.load %arg2[%c0_3, %c0_4, %c0_5] : memref<4x32x1xf32, #tpu.memory_space<vmem>>, vector<4x32x1xf32>
    %c0_6 = arith.constant 0 : index
    %c0_7 = arith.constant 0 : index
    %5 = vector.load %arg3[%c0_6, %c0_7] : memref<32x1xf32, #tpu.memory_space<vmem>>, vector<32x1xf32>
    %6 = vector.extract_strided_slice %3 {offsets = [0, 0, 0], sizes = [8, 1, 128], strides = [1, 1, 1]} : vector<8x4x128xf32> to vector<8x1x128xf32>
    %7 = vector.extract_strided_slice %4 {offsets = [0, 0, 0], sizes = [1, 32, 1], strides = [1, 1, 1]} : vector<4x32x1xf32> to vector<1x32x1xf32>
    %8 = vector.broadcast %6 : vector<8x1x128xf32> to vector<8x32x128xf32>
    %9 = vector.broadcast %7 : vector<1x32x1xf32> to vector<8x32x128xf32>
    %10 = arith.mulf %8, %9 : vector<8x32x128xf32>
    %11 = vector.extract_strided_slice %3 {offsets = [0, 1, 0], sizes = [8, 1, 128], strides = [1, 1, 1]} : vector<8x4x128xf32> to vector<8x1x128xf32>
    %12 = vector.extract_strided_slice %4 {offsets = [1, 0, 0], sizes = [1, 32, 1], strides = [1, 1, 1]} : vector<4x32x1xf32> to vector<1x32x1xf32>
    %13 = vector.broadcast %11 : vector<8x1x128xf32> to vector<8x32x128xf32>
    %14 = vector.broadcast %12 : vector<1x32x1xf32> to vector<8x32x128xf32>
    %15 = arith.mulf %13, %14 : vector<8x32x128xf32>
    %16 = arith.addf %10, %15 : vector<8x32x128xf32>
    %17 = vector.extract_strided_slice %3 {offsets = [0, 2, 0], sizes = [8, 1, 128], strides = [1, 1, 1]} : vector<8x4x128xf32> to vector<8x1x128xf32>
    %18 = vector.extract_strided_slice %4 {offsets = [2, 0, 0], sizes = [1, 32, 1], strides = [1, 1, 1]} : vector<4x32x1xf32> to vector<1x32x1xf32>
    %19 = vector.broadcast %17 : vector<8x1x128xf32> to vector<8x32x128xf32>
    %20 = vector.broadcast %18 : vector<1x32x1xf32> to vector<8x32x128xf32>
    %21 = arith.mulf %19, %20 : vector<8x32x128xf32>
    %22 = arith.addf %16, %21 : vector<8x32x128xf32>
    %23 = vector.extract_strided_slice %3 {offsets = [0, 3, 0], sizes = [8, 1, 128], strides = [1, 1, 1]} : vector<8x4x128xf32> to vector<8x1x128xf32>
    %24 = vector.extract_strided_slice %4 {offsets = [3, 0, 0], sizes = [1, 32, 1], strides = [1, 1, 1]} : vector<4x32x1xf32> to vector<1x32x1xf32>
    %25 = vector.broadcast %23 : vector<8x1x128xf32> to vector<8x32x128xf32>
    %26 = vector.broadcast %24 : vector<1x32x1xf32> to vector<8x32x128xf32>
    %27 = arith.mulf %25, %26 : vector<8x32x128xf32>
    %28 = arith.addf %22, %27 : vector<8x32x128xf32>
    %29 = vector.shape_cast %5 : vector<32x1xf32> to vector<1x32x1xf32>
    %30 = vector.broadcast %29 : vector<1x32x1xf32> to vector<8x32x128xf32>
    %31 = arith.addf %28, %30 : vector<8x32x128xf32>
    %cst = arith.constant 0.000000e+00 : f32
    %32 = vector.broadcast %cst : f32 to vector<8x32x128xf32>
    %33 = arith.maximumf %31, %32 : vector<8x32x128xf32>
    %c0_8 = arith.constant 0 : index
    %c0_9 = arith.constant 0 : index
    %34 = vector.load %arg9[%c0_8, %c0_9] : memref<8x32xf32, #tpu.memory_space<vmem>>, vector<8x32xf32>
    %cst_10 = arith.constant dense<0.000000e+00> : vector<8x32xf32>
    %35 = vector.multi_reduction <add>, %33, %cst_10 [2] : vector<8x32x128xf32> to vector<8x32xf32>
    %36 = arith.addf %34, %35 : vector<8x32xf32>
    %c0_11 = arith.constant 0 : index
    %c0_12 = arith.constant 0 : index
    %37 = vector.load %arg9[%c0_11, %c0_12] : memref<8x32xf32, #tpu.memory_space<vmem>>, vector<8x32xf32>
    tpu.vector_store %arg9[%c0_11, %c0_12], %36 {strides = array<i32>} : memref<8x32xf32, #tpu.memory_space<vmem>>, vector<8x32xf32>,
    %c1_i32 = arith.constant 1 : i32
    %38 = arith.cmpi eq, %arg0, %c1_i32 : i32
    %39 = arith.extui %38 : i1 to i32
    %c0_i32_13 = arith.constant 0 : i32
    %40 = arith.cmpi ne, %39, %c0_i32_13 : i32
    scf.if %40 {
      %c0_14 = arith.constant 0 : index
      %c0_15 = arith.constant 0 : index
      %41 = vector.load %arg9[%c0_14, %c0_15] : memref<8x32xf32, #tpu.memory_space<vmem>>, vector<8x32xf32>
      %cst_16 = arith.constant 3.906250e-03 : f32
      %42 = vector.broadcast %cst_16 : f32 to vector<8x32xf32>
      %43 = arith.mulf %41, %42 : vector<8x32xf32>
      %c0_17 = arith.constant 0 : index
      %c0_18 = arith.constant 0 : index
      %44 = vector.load %arg4[%c0_17, %c0_18] : memref<32x10xf32, #tpu.memory_space<vmem>>, vector<32x10xf32>
      %cst_19 = arith.constant dense<0.000000e+00> : vector<8x10xf32>
      %45 = tpu.matmul %43, %44, %cst_19 {dimension_numbers = #tpu.dot_dimension_numbers<[1], [0], [0], [1], [0, 0, 1, 1], [], []>, precision = #tpu.contract_precision<fp32>} : vector<8x32xf32>, vector<32x10xf32>, vector<8x10xf32> -> vector<8x10xf32>
      %c0_20 = arith.constant 0 : index
      %c0_21 = arith.constant 0 : index
      %46 = vector.load %arg5[%c0_20, %c0_21] : memref<1x10xf32, #tpu.memory_space<vmem>>, vector<1x10xf32>
      %47 = vector.broadcast %46 : vector<1x10xf32> to vector<8x10xf32>
      %48 = arith.addf %45, %47 : vector<8x10xf32>
      %cst_22 = arith.constant dense<0.000000e+00> : vector<32xf32>
      %49 = vector.multi_reduction <add>, %43, %cst_22 [0] : vector<8x32xf32> to vector<32xf32>
      %50 = vector.shape_cast %49 : vector<32xf32> to vector<1x32xf32>
      %cst_23 = arith.constant 8.000000e+00 : f32
      %51 = vector.broadcast %cst_23 : f32 to vector<1x32xf32>
      %52 = arith.divf %50, %51 : vector<1x32xf32>
      %53 = vector.broadcast %52 : vector<1x32xf32> to vector<8x32xf32>
      %54 = arith.subf %43, %53 : vector<8x32xf32>
      %55 = arith.mulf %54, %54 : vector<8x32xf32>
      %cst_24 = arith.constant dense<0.000000e+00> : vector<32xf32>
      %56 = vector.multi_reduction <add>, %55, %cst_24 [0] : vector<8x32xf32> to vector<32xf32>
      %57 = vector.shape_cast %56 : vector<32xf32> to vector<1x32xf32>
      %cst_25 = arith.constant 8.000000e+00 : f32
      %58 = vector.broadcast %cst_25 : f32 to vector<1x32xf32>
      %59 = arith.divf %57, %58 : vector<1x32xf32>
      %cst_26 = arith.constant 9.99999974E-6 : f32
      %60 = vector.broadcast %cst_26 : f32 to vector<1x32xf32>
      %61 = arith.addf %59, %60 : vector<1x32xf32>
      %62 = math.rsqrt %61 : vector<1x32xf32>
      %c0_27 = arith.constant 0 : index
      %c0_28 = arith.constant 0 : index
      %63 = vector.load %arg6[%c0_27, %c0_28] : memref<1x32xf32, #tpu.memory_space<vmem>>, vector<1x32xf32>
      %64 = arith.mulf %62, %63 : vector<1x32xf32>
      %c0_29 = arith.constant 0 : index
      %c0_30 = arith.constant 0 : index
      %65 = vector.load %arg7[%c0_29, %c0_30] : memref<1x32xf32, #tpu.memory_space<vmem>>, vector<1x32xf32>
      %66 = arith.mulf %52, %64 : vector<1x32xf32>
      %67 = arith.subf %65, %66 : vector<1x32xf32>
      %68 = vector.broadcast %64 : vector<1x32xf32> to vector<8x32xf32>
      %69 = arith.mulf %43, %68 : vector<8x32xf32>
      %70 = vector.broadcast %67 : vector<1x32xf32> to vector<8x32xf32>
      %71 = arith.addf %69, %70 : vector<8x32xf32>
      %c0_31 = arith.constant 0 : index
      %c0_32 = arith.constant 0 : index
      %72 = vector.load %arg8[%c0_31, %c0_32] : memref<8x128xf32, #tpu.memory_space<vmem>>, vector<8x10xf32>
      tpu.vector_store %arg8[%c0_31, %c0_32], %48 {strides = array<i32>} : memref<8x128xf32, #tpu.memory_space<vmem>>, vector<8x10xf32>,
      %c0_33 = arith.constant 0 : index
      %c10 = arith.constant 10 : index
      %73 = vector.load %arg8[%c0_33, %c10] : memref<8x128xf32, #tpu.memory_space<vmem>>, vector<8x32xf32>
      tpu.vector_store %arg8[%c0_33, %c10], %43 {strides = array<i32>} : memref<8x128xf32, #tpu.memory_space<vmem>>, vector<8x32xf32>,
      %c0_34 = arith.constant 0 : index
      %c42 = arith.constant 42 : index
      %74 = vector.load %arg8[%c0_34, %c42] : memref<8x128xf32, #tpu.memory_space<vmem>>, vector<8x32xf32>
      tpu.vector_store %arg8[%c0_34, %c42], %71 {strides = array<i32>} : memref<8x128xf32, #tpu.memory_space<vmem>>, vector<8x32xf32>,
      %cst_35 = arith.constant 0.000000e+00 : f32
      %75 = vector.broadcast %cst_35 : f32 to vector<8x54xf32>
      %c0_36 = arith.constant 0 : index
      %c74 = arith.constant 74 : index
      %76 = vector.load %arg8[%c0_36, %c74] : memref<8x128xf32, #tpu.memory_space<vmem>>, vector<8x54xf32>
      tpu.vector_store %arg8[%c0_36, %c74], %75 {strides = array<i32>} : memref<8x128xf32, #tpu.memory_space<vmem>>, vector<8x54xf32>,
    } else {
    }
    return
  }
  func.func @transform_0(%arg0: i32) -> (i32, i32, i32) {
    %c0_i32 = arith.constant 0 : i32
    %c0_i32_0 = arith.constant 0 : i32
    %c0_i32_1 = arith.constant 0 : i32
    return %c0_i32, %c0_i32_0, %arg0 : i32, i32, i32
  }
  func.func @transform_1(%arg0: i32) -> (i32, i32, i32) {
    %c0_i32 = arith.constant 0 : i32
    %c0_i32_0 = arith.constant 0 : i32
    %c0_i32_1 = arith.constant 0 : i32
    %c0_i32_2 = arith.constant 0 : i32
    return %c0_i32, %c0_i32_0, %c0_i32_1 : i32, i32, i32
  }
  func.func @transform_2(%arg0: i32) -> (i32, i32) {
    %c0_i32 = arith.constant 0 : i32
    %c0_i32_0 = arith.constant 0 : i32
    %c0_i32_1 = arith.constant 0 : i32
    return %c0_i32, %c0_i32_0 : i32, i32
  }
  func.func @transform_3(%arg0: i32) -> (i32, i32) {
    %c0_i32 = arith.constant 0 : i32
    %c0_i32_0 = arith.constant 0 : i32
    %c0_i32_1 = arith.constant 0 : i32
    return %c0_i32, %c0_i32_0 : i32, i32
  }
  func.func @transform_4(%arg0: i32) -> (i32, i32) {
    %c0_i32 = arith.constant 0 : i32
    %c0_i32_0 = arith.constant 0 : i32
    %c0_i32_1 = arith.constant 0 : i32
    return %c0_i32, %c0_i32_0 : i32, i32
  }
  func.func @transform_5(%arg0: i32) -> (i32, i32) {
    %c0_i32 = arith.constant 0 : i32
    %c0_i32_0 = arith.constant 0 : i32
    %c0_i32_1 = arith.constant 0 : i32
    return %c0_i32, %c0_i32_0 : i32, i32
  }
  func.func @transform_6(%arg0: i32) -> (i32, i32) {
    %c0_i32 = arith.constant 0 : i32
    %c0_i32_0 = arith.constant 0 : i32
    %c0_i32_1 = arith.constant 0 : i32
    return %c0_i32, %c0_i32_0 : i32, i32
  }
  func.func @transform_7(%arg0: i32) -> (i32, i32) {
    %c0_i32 = arith.constant 0 : i32
    %c0_i32_0 = arith.constant 0 : i32
    %c0_i32_1 = arith.constant 0 : i32
    return %c0_i32, %c0_i32_0 : i32, i32
  }
}

</mosaic_0001>

<llo_original>
// kernel: tpu_custom_call.1
$region0: #{tpu_custom_call.1}
  #allocation0 [shape = 'u32[]', space=smem, size = 0x4, offset = 0x4, fixed_abs, tag = 'smem constant byte address 0x4 - core index']
  #allocation1 [shape = 'u32[144,128]{1,0:T(1,128)}', space=vmem, size = 0x12000, scoped, tag = 'internal scratch']
  #allocation2 [shape = 'f32[8,32]{1,0:T(8,128)}', space=vmem, size = 0x1000, scoped, tag = 'scratch operand']
  %s0 = inlined_call_operand.vmem [shape: f32[8,4,256], index: 0, kind: input, shape index: {}]
  %s1 = inlined_call_operand.vmem [shape: f32[4,32,1], index: 1, kind: input, shape index: {}]
  %s2 = inlined_call_operand.vmem [shape: f32[32,1], index: 2, kind: input, shape index: {}]
  %s3 = inlined_call_operand.vmem [shape: f32[32,10], index: 3, kind: input, shape index: {}]
  %s4 = inlined_call_operand.vmem [shape: f32[1,10], index: 4, kind: input, shape index: {}]
  %s5 = inlined_call_operand.vmem [shape: f32[1,32], index: 5, kind: input, shape index: {}]
  %s6 = inlined_call_operand.vmem [shape: f32[1,32], index: 6, kind: input, shape index: {}]
  %s7 = inlined_call_operand.hbm [shape: f32[8,128], index: 7, kind: output, shape index: {}]
  %s8 = sld [smem:[#allocation0]]
  $region110: #{tpu_custom_call.1} parent=0
    _
  %s10 = ssub.s32 1, %s8
  %s11 = scalar_select 0, %s10, %s8
  $region1: #{tpu_custom_call.1} parent=0
    #allocation3 [shape = 'u8[32768]{0}', space=vmem, size = 0x8000, scoped, tag = 'input window, operand 0']
    #allocation4 [shape = 'u8[4096]{0}', space=vmem, size = 0x1000, scoped, tag = 'output window, operand 0, single buffered']
    #allocation5 [shape = 's32[2]{0}', space=sflag, size = 0x8, scoped, tag = 'scoped memory for tpu_custom_call.1']
    %12 = vsyncpa [#allocation5], 0
    loop: start=0, step=1, limit=4
    $region2: #{tpu_custom_call.1} parent=1 // loop_pre_header
      _
    $region3: #{tpu_custom_call.1} parent=1 // loop_header
      %s14 = sphi 0, %s18
      %p15 = scmp.ge.s32.totalorder %s14, 4
      %s24 = sphi 0, %s26
      %s27 = sphi 0, %s24
      %s28 = sphi 0, %s27
      %s44 = sphi 0, %s28
      %s48 = sphi 0, %s48
      %s50 = sphi 0, %s48
      %s51 = sphi 0, %s50
      %s65 = sphi 0, %s51
      %s69 = sphi 0, %s69
      %s71 = sphi 0, %s69
      %s72 = sphi 0, %s71
      %s86 = sphi 0, %s72
      %s90 = sphi 0, %s90
      %s92 = sphi 0, %s90
      %s93 = sphi 0, %s92
      %s107 = sphi 0, %s93
      %s111 = sphi 0, %s111
      %s113 = sphi 0, %s111
      %s114 = sphi 0, %s113
      %s128 = sphi 0, %s114
      %s132 = sphi 0, %s132
      %s134 = sphi 0, %s132
      %s135 = sphi 0, %s134
      %s149 = sphi 0, %s135
      %s153 = sphi 0, %s153
      %s155 = sphi 0, %s153
      %s156 = sphi 0, %s155
      %s170 = sphi 0, %s156
      %s174 = sphi 0, %s174
      %s176 = sphi 0, %s174
      %s177 = sphi 0, %s176
      %s191 = sphi 0, %s177
    $region4: #{tpu_custom_call.1} parent=1 // loop_header_branch
      %17 = sbr.rel (%p15) target = $region8
    $region5: #{tpu_custom_call.1} parent=1 // loop_body
      %s19 = ssub.s32 %s14, 1
      %s20 = ssub.s32 %s14, 2
      %s21 = sadd.s32 %s14, 1
      %s22 = ssub.s32 %s14, %s21
      %p23 = scmp.eq.s32.totalorder %s22, 0
      %s25 = sadd.s32 %s24, 1
      %s26 = scalar_select %p23, %s24, %s25
      %p29 = pneg %p23
      %p30 = scmp.eq.s32.totalorder %s14, 1
      %p31 = por %p29, %p30
      %p32 = scmp.ne.s32.totalorder %s24, %s27
      %p33 = scmp.eq.s32.totalorder %s14, 0
      %p34 = por %p32, %p33
      %p35 = scmp.ne.s32.totalorder %s24, %s27
      %p36 = scmp.eq.s32.totalorder %s19, 1
      %p37 = por %p35, %p36
      %p38 = scmp.ne.s32.totalorder %s27, %s28
      %p39 = scmp.eq.s32.totalorder %s19, 0
      %p40 = por %p38, %p39
      %p41 = scmp.ne.s32.totalorder %s27, %s28
      %p42 = scmp.eq.s32.totalorder %s20, 1
      %p43 = por %p41, %p42
      %p45 = scmp.ne.s32.totalorder %s28, %s44
      %p46 = scmp.eq.s32.totalorder %s20, 0
      %p47 = por %p45, %p46
      %s49 = sadd.s32 %s48, 1
      %p52 = scmp.eq.s32.totalorder %s14, 1
      %p53 = scmp.ne.s32.totalorder %s48, %s50
      %p54 = scmp.eq.s32.totalorder %s14, 0
      %p55 = por %p53, %p54
      %p56 = scmp.ne.s32.totalorder %s48, %s50
      %p57 = scmp.eq.s32.totalorder %s19, 1
      %p58 = por %p56, %p57
      %p59 = scmp.ne.s32.totalorder %s50, %s51
      %p60 = scmp.eq.s32.totalorder %s19, 0
      %p61 = por %p59, %p60
      %p62 = scmp.ne.s32.totalorder %s50, %s51
      %p63 = scmp.eq.s32.totalorder %s20, 1
      %p64 = por %p62, %p63
      %p66 = scmp.ne.s32.totalorder %s51, %s65
      %p67 = scmp.eq.s32.totalorder %s20, 0
      %p68 = por %p66, %p67
      %s70 = sadd.s32 %s69, 1
      %p73 = scmp.eq.s32.totalorder %s14, 1
      %p74 = scmp.ne.s32.totalorder %s69, %s71
      %p75 = scmp.eq.s32.totalorder %s14, 0
      %p76 = por %p74, %p75
      %p77 = scmp.ne.s32.totalorder %s69, %s71
      %p78 = scmp.eq.s32.totalorder %s19, 1
      %p79 = por %p77, %p78
      %p80 = scmp.ne.s32.totalorder %s71, %s72
      %p81 = scmp.eq.s32.totalorder %s19, 0
      %p82 = por %p80, %p81
      %p83 = scmp.ne.s32.totalorder %s71, %s72
      %p84 = scmp.eq.s32.totalorder %s20, 1
      %p85 = por %p83, %p84
      %p87 = scmp.ne.s32.totalorder %s72, %s86
      %p88 = scmp.eq.s32.totalorder %s20, 0
      %p89 = por %p87, %p88
      %s91 = sadd.s32 %s90, 1
      %p94 = scmp.eq.s32.totalorder %s14, 1
      %p95 = scmp.ne.s32.totalorder %s90, %s92
      %p96 = scmp.eq.s32.totalorder %s14, 0
      %p97 = por %p95, %p96
      %p98 = scmp.ne.s32.totalorder %s90, %s92
      %p99 = scmp.eq.s32.totalorder %s19, 1
      %p100 = por %p98, %p99
      %p101 = scmp.ne.s32.totalorder %s92, %s93
      %p102 = scmp.eq.s32.totalorder %s19, 0
      %p103 = por %p101, %p102
      %p104 = scmp.ne.s32.totalorder %s92, %s93
      %p105 = scmp.eq.s32.totalorder %s20, 1
      %p106 = por %p104, %p105
      %p108 = scmp.ne.s32.totalorder %s93, %s107
      %p109 = scmp.eq.s32.totalorder %s20, 0
      %p110 = por %p108, %p109
      %s112 = sadd.s32 %s111, 1
      %p115 = scmp.eq.s32.totalorder %s14, 1
      %p116 = scmp.ne.s32.totalorder %s111, %s113
      %p117 = scmp.eq.s32.totalorder %s14, 0
      %p118 = por %p116, %p117
      %p119 = scmp.ne.s32.totalorder %s111, %s113
      %p120 = scmp.eq.s32.totalorder %s19, 1
      %p121 = por %p119, %p120
      %p122 = scmp.ne.s32.totalorder %s113, %s114
      %p123 = scmp.eq.s32.totalorder %s19, 0
      %p124 = por %p122, %p123
      %p125 = scmp.ne.s32.totalorder %s113, %s114
      %p126 = scmp.eq.s32.totalorder %s20, 1
      %p127 = por %p125, %p126
      %p129 = scmp.ne.s32.totalorder %s114, %s128
      %p130 = scmp.eq.s32.totalorder %s20, 0
      %p131 = por %p129, %p130
      %s133 = sadd.s32 %s132, 1
      %p136 = scmp.eq.s32.totalorder %s14, 1
      %p137 = scmp.ne.s32.totalorder %s132, %s134
      %p138 = scmp.eq.s32.totalorder %s14, 0
      %p139 = por %p137, %p138
      %p140 = scmp.ne.s32.totalorder %s132, %s134
      %p141 = scmp.eq.s32.totalorder %s19, 1
      %p142 = por %p140, %p141
      %p143 = scmp.ne.s32.totalorder %s134, %s135
      %p144 = scmp.eq.s32.totalorder %s19, 0
      %p145 = por %p143, %p144
      %p146 = scmp.ne.s32.totalorder %s134, %s135
      %p147 = scmp.eq.s32.totalorder %s20, 1
      %p148 = por %p146, %p147
      %p150 = scmp.ne.s32.totalorder %s135, %s149
      %p151 = scmp.eq.s32.totalorder %s20, 0
      %p152 = por %p150, %p151
      %s154 = sadd.s32 %s153, 1
      %p157 = scmp.eq.s32.totalorder %s14, 1
      %p158 = scmp.ne.s32.totalorder %s153, %s155
      %p159 = scmp.eq.s32.totalorder %s14, 0
      %p160 = por %p158, %p159
      %p161 = scmp.ne.s32.totalorder %s153, %s155
      %p162 = scmp.eq.s32.totalorder %s19, 1
      %p163 = por %p161, %p162
      %p164 = scmp.ne.s32.totalorder %s155, %s156
      %p165 = scmp.eq.s32.totalorder %s19, 0
      %p166 = por %p164, %p165
      %p167 = scmp.ne.s32.totalorder %s155, %s156
      %p168 = scmp.eq.s32.totalorder %s20, 1
      %p169 = por %p167, %p168
      %p171 = scmp.ne.s32.totalorder %s156, %s170
      %p172 = scmp.eq.s32.totalorder %s20, 0
      %p173 = por %p171, %p172
      %s175 = sadd.s32 %s174, 1
      %p178 = scmp.eq.s32.totalorder %s14, 1
      %p179 = scmp.ne.s32.totalorder %s174, %s176
      %p180 = scmp.eq.s32.totalorder %s14, 0
      %p181 = por %p179, %p180
      %p182 = scmp.ne.s32.totalorder %s174, %s176
      %p183 = scmp.eq.s32.totalorder %s19, 1
      %p184 = por %p182, %p183
      %p185 = scmp.ne.s32.totalorder %s176, %s177
      %p186 = scmp.eq.s32.totalorder %s19, 0
      %p187 = por %p185, %p186
      %p188 = scmp.ne.s32.totalorder %s176, %s177
      %p189 = scmp.eq.s32.totalorder %s20, 1
      %p190 = por %p188, %p189
      %p192 = scmp.ne.s32.totalorder %s177, %s191
      %p193 = scmp.eq.s32.totalorder %s20, 0
      %p194 = por %p192, %p193
      %p195 = scmp.le.s32.totalorder 1, %s14
      %p196 = scmp.lt.s32.totalorder %s14, 3
      %p197 = pnand %p195, %p196
      %p198 = pneg %p197
      // Predicated region
      $region9: #{tpu_custom_call.1} parent=5 // pred_check
        _
      $region10: #{tpu_custom_call.1} parent=5 // pred_check_branch
        %200 = sbr.rel (%p197) target = $region12
      $region11: #{tpu_custom_call.1} parent=5 // pred_region
        %s201 = ssub.s32 %s14, 1
        // Predicated region
        $region13: #{tpu_custom_call.1} parent=11 // pred_check
          %p202 = pneg %p61
        $region14: #{tpu_custom_call.1} parent=11 // pred_check_branch
          %204 = sbr.rel (%p202) target = $region16
        $region15: #{tpu_custom_call.1} parent=11 // pred_region
          _
        $region16: #{tpu_custom_call.1} parent=11 // pred_fallthru
          _
        // Predicated region
        $region17: #{tpu_custom_call.1} parent=11 // pred_check
          %p205 = pneg %p82
        $region18: #{tpu_custom_call.1} parent=11 // pred_check_branch
          %207 = sbr.rel (%p205) target = $region20
        $region19: #{tpu_custom_call.1} parent=11 // pred_region
          _
        $region20: #{tpu_custom_call.1} parent=11 // pred_fallthru
          _
        // Predicated region
        $region21: #{tpu_custom_call.1} parent=11 // pred_check
          %p208 = pneg %p103
        $region22: #{tpu_custom_call.1} parent=11 // pred_check_branch
          %210 = sbr.rel (%p208) target = $region24
        $region23: #{tpu_custom_call.1} parent=11 // pred_region
          _
        $region24: #{tpu_custom_call.1} parent=11 // pred_fallthru
          _
        // Predicated region
        $region25: #{tpu_custom_call.1} parent=11 // pred_check
          %p211 = pneg %p124
        $region26: #{tpu_custom_call.1} parent=11 // pred_check_branch
          %213 = sbr.rel (%p211) target = $region28
        $region27: #{tpu_custom_call.1} parent=11 // pred_region
          _
        $region28: #{tpu_custom_call.1} parent=11 // pred_fallthru
          _
        // Predicated region
        $region29: #{tpu_custom_call.1} parent=11 // pred_check
          %p214 = pneg %p145
        $region30: #{tpu_custom_call.1} parent=11 // pred_check_branch
          %216 = sbr.rel (%p214) target = $region32
        $region31: #{tpu_custom_call.1} parent=11 // pred_region
          _
        $region32: #{tpu_custom_call.1} parent=11 // pred_fallthru
          _
        // Predicated region
        $region33: #{tpu_custom_call.1} parent=11 // pred_check
          %p217 = pneg %p166
        $region34: #{tpu_custom_call.1} parent=11 // pred_check_branch
          %219 = sbr.rel (%p217) target = $region36
        $region35: #{tpu_custom_call.1} parent=11 // pred_region
          _
        $region36: #{tpu_custom_call.1} parent=11 // pred_fallthru
          _
      $region12: #{tpu_custom_call.1} parent=5 // pred_fallthru
        _
      %p220 = scmp.lt.s32.totalorder %s14, 2
      // Predicated region
      $region37: #{tpu_custom_call.1} parent=5 // pred_check
        %p221 = pneg %p220
      $region38: #{tpu_custom_call.1} parent=5 // pred_check_branch
        %223 = sbr.rel (%p221) target = $region40
      $region39: #{tpu_custom_call.1} parent=5 // pred_region
        // Predicated region
        $region41: #{tpu_custom_call.1} parent=39 // pred_check
          %p224 = pneg %p34
        $region42: #{tpu_custom_call.1} parent=39 // pred_check_branch
          %226 = sbr.rel (%p224) target = $region44
        $region43: #{tpu_custom_call.1} parent=39 // pred_region
          %s227 = sand.u32 %s24, 1
          %s228 = sand.u32 %s24, 1
          %s229 = smul.addr %s228, 32
          %s230 = scalar_lea.vmem [#allocation3], %s229
          %s231 = smul.addr %s14, 4
          %s232 = scalar_lea.vmem %s0, %s231
          // Predicated region
          $region45: #{tpu_custom_call.1} parent=43 // pred_check
            _
          $region46: #{tpu_custom_call.1} parent=43 // pred_check_branch
            %234 = sbr.rel (0) target = $region48
          $region47: #{tpu_custom_call.1} parent=43 // pred_region
            // Predicated region
            $region49: #{tpu_custom_call.1} parent=47 // pred_check
              _
            $region50: #{tpu_custom_call.1} parent=47 // pred_check_branch
              %236 = sbr.rel target = $region52
            $region51: #{tpu_custom_call.1} parent=47 // pred_region
              // Predicated region
              $region64: #{tpu_custom_call.1} parent=51 // pred_check
                _
              $region65: #{tpu_custom_call.1} parent=51 // pred_check_branch
                %266 = sbr.rel (0) target = $region67
              $region66: #{tpu_custom_call.1} parent=51 // pred_region
                loop: start=0, step=1, limit=1
                $region68: #{tpu_custom_call.1} parent=66 // loop_pre_header
                  _
                $region69: #{tpu_custom_call.1} parent=66 // loop_header
                  %s268 = sphi 0, %s272
                  %p269 = scmp.ge.s32.totalorder %s268, 1
                  %s273 = sphi %s232, %s232
                  %s274 = sphi %s230, %s230
                $region70: #{tpu_custom_call.1} parent=66 // loop_header_branch
                  %271 = sbr.rel (%p269) target = $region74
                $region71: #{tpu_custom_call.1} parent=66 // loop_body
                  _
                $region72: #{tpu_custom_call.1} parent=66 // loop_footer
                  %s272 = sadd.s32 1, %s268
                $region73: #{tpu_custom_call.1} parent=66 // loop_footer_branch
                  %267 = sbr.rel target = $region69
                $region74: #{tpu_custom_call.1} parent=66 // loop_exit
                  _
                %s276 = ssub.s32 16, 1
                loop: start=0, step=1, limit=1
                $region75: #{tpu_custom_call.1} parent=66 // loop_pre_header
                  _
                $region76: #{tpu_custom_call.1} parent=66 // loop_header
                  %s278 = sphi 0, %s282
                  %p279 = scmp.ge.s32.totalorder %s278, 1
                  %s283 = sphi %s232, %s232
                  %s284 = sphi %s230, %s230
                $region77: #{tpu_custom_call.1} parent=66 // loop_header_branch
                  %281 = sbr.rel (%p279) target = $region81
                $region78: #{tpu_custom_call.1} parent=66 // loop_body
                  %v285 = vld [vmem:[%s283] sm:%s276]
                  %286 = vst [vmem:[%s284] sm:%s276] %v285
                  %v287 = vld [vmem:[%s283 + $0x8] sm:%s276]
                  %288 = vst [vmem:[%s284 + $0x4] sm:%s276] %v287
                  %v289 = vld [vmem:[%s283 + $0x10] sm:%s276]
                  %290 = vst [vmem:[%s284 + $0x8] sm:%s276] %v289
                  %v291 = vld [vmem:[%s283 + $0x18] sm:%s276]
                  %292 = vst [vmem:[%s284 + $0xc] sm:%s276] %v291
                  %v293 = vld [vmem:[%s283 + $0x20] sm:%s276]
                  %294 = vst [vmem:[%s284 + $0x10] sm:%s276] %v293
                  %v295 = vld [vmem:[%s283 + $0x28] sm:%s276]
                  %296 = vst [vmem:[%s284 + $0x14] sm:%s276] %v295
                  %v297 = vld [vmem:[%s283 + $0x30] sm:%s276]
                  %298 = vst [vmem:[%s284 + $0x18] sm:%s276] %v297
                  %v299 = vld [vmem:[%s283 + $0x38] sm:%s276]
                  %300 = vst [vmem:[%s284 + $0x1c] sm:%s276] %v299
                $region79: #{tpu_custom_call.1} parent=66 // loop_footer
                  %s282 = sadd.s32 1, %s278
                $region80: #{tpu_custom_call.1} parent=66 // loop_footer_branch
                  %277 = sbr.rel target = $region76
                $region81: #{tpu_custom_call.1} parent=66 // loop_exit
                  _
              $region67: #{tpu_custom_call.1} parent=51 // pred_fallthru
                _
            $region52: #{tpu_custom_call.1} parent=47 // pred_fallthru
              _
            // Predicated region
            $region53: #{tpu_custom_call.1} parent=47 // pred_check
              _
            $region54: #{tpu_custom_call.1} parent=47 // pred_check_branch
              %238 = sbr.rel (0) target = $region56
            $region55: #{tpu_custom_call.1} parent=47 // pred_region
              %s240 = ssub.s32 16, 1
              loop: start=0, step=1, limit=1
              $region57: #{tpu_custom_call.1} parent=55 // loop_pre_header
                _
              $region58: #{tpu_custom_call.1} parent=55 // loop_header
                %s242 = sphi 0, %s246
                %p243 = scmp.ge.s32.totalorder %s242, 1
                %s247 = sphi %s232, %s232
                %s248 = sphi %s230, %s230
              $region59: #{tpu_custom_call.1} parent=55 // loop_header_branch
                %245 = sbr.rel (%p243) target = $region63
              $region60: #{tpu_custom_call.1} parent=55 // loop_body
                %v249 = vld [vmem:[%s247] sm:%s240]
                %250 = vst [vmem:[%s248] sm:%s240] %v249
                %v251 = vld [vmem:[%s247 + $0x8] sm:%s240]
                %252 = vst [vmem:[%s248 + $0x4] sm:%s240] %v251
                %v253 = vld [vmem:[%s247 + $0x10] sm:%s240]
                %254 = vst [vmem:[%s248 + $0x8] sm:%s240] %v253
                %v255 = vld [vmem:[%s247 + $0x18] sm:%s240]
                %256 = vst [vmem:[%s248 + $0xc] sm:%s240] %v255
                %v257 = vld [vmem:[%s247 + $0x20] sm:%s240]
                %258 = vst [vmem:[%s248 + $0x10] sm:%s240] %v257
                %v259 = vld [vmem:[%s247 + $0x28] sm:%s240]
                %260 = vst [vmem:[%s248 + $0x14] sm:%s240] %v259
                %v261 = vld [vmem:[%s247 + $0x30] sm:%s240]
                %262 = vst [vmem:[%s248 + $0x18] sm:%s240] %v261
                %v263 = vld [vmem:[%s247 + $0x38] sm:%s240]
                %264 = vst [vmem:[%s248 + $0x1c] sm:%s240] %v263
              $region61: #{tpu_custom_call.1} parent=55 // loop_footer
                %s246 = sadd.s32 1, %s242
              $region62: #{tpu_custom_call.1} parent=55 // loop_footer_branch
                %241 = sbr.rel target = $region58
              $region63: #{tpu_custom_call.1} parent=55 // loop_exit
                _
            $region56: #{tpu_custom_call.1} parent=47 // pred_fallthru
              _
          $region48: #{tpu_custom_call.1} parent=43 // pred_fallthru
            _
          %301 = vnop
        $region44: #{tpu_custom_call.1} parent=39 // pred_fallthru
          _
      $region40: #{tpu_custom_call.1} parent=5 // pred_fallthru
        _
      %p302 = scmp.le.s32.totalorder 1, %s14
      %p303 = scmp.lt.s32.totalorder %s14, 3
      %p304 = pnand %p302, %p303
      %p305 = pneg %p304
      // Predicated region
      $region82: #{tpu_custom_call.1} parent=5 // pred_check
        _
      $region83: #{tpu_custom_call.1} parent=5 // pred_check_branch
        %307 = sbr.rel (%p304) target = $region85
      $region84: #{tpu_custom_call.1} parent=5 // pred_region
        %s308 = ssub.s32 %s14, 1
        %s309 = sand.u32 %s27, 1
        %s310 = sand.u32 %s27, 1
        %s311 = smul.addr %s310, 32
        %s312 = scalar_lea.vmem [#allocation3], %s311
        // Predicated region
        $region86: #{tpu_custom_call.1} parent=84 // pred_check
          %p313 = pneg %p40
        $region87: #{tpu_custom_call.1} parent=84 // pred_check_branch
          %315 = sbr.rel (%p313) target = $region89
        $region88: #{tpu_custom_call.1} parent=84 // pred_region
          _
        $region89: #{tpu_custom_call.1} parent=84 // pred_fallthru
          _
        %s316 = sand.u32 %s27, 1
        %s317 = sand.u32 %s27, 1
        %s318 = smul.addr %s317, 32
        %s319 = scalar_lea.vmem [#allocation3], %s318
        %p320 = pneg %p40
        %p321 = pneg %p37
        %p322 = pneg %p61
        %p323 = pneg %p58
        %p324 = pneg %p82
        %p325 = pneg %p79
        %p326 = pneg %p103
        %p327 = pneg %p100
        %p328 = pneg %p124
        %p329 = pneg %p121
        %p330 = pneg %p145
        %p331 = pneg %p142
        %p332 = pneg %p166
        %p333 = pneg %p163
        %p334 = pneg %p187
        %p335 = pneg %p184
        %p336 = scmp.eq.s32.totalorder %s19, 0
        // Predicated region
        $region90: #{tpu_custom_call.1} parent=84 // pred_check
          %p337 = pneg %p336
        $region91: #{tpu_custom_call.1} parent=84 // pred_check_branch
          %339 = sbr.rel (%p337) target = $region93
        $region92: #{tpu_custom_call.1} parent=84 // pred_region
          %vm340 = vcmask 261120
          %341 = vst.msk [vmem:[#allocation2] sm:$0xff] %vm340, 0.0
        $region93: #{tpu_custom_call.1} parent=84 // pred_fallthru
          _
        %v342 = vld [vmem:[%s312] sm:$0xf]
        %v343 = vld [vmem:[%s312 + $0x4] sm:$0xf]
        %v344 = vld [vmem:[%s312 + $0x8] sm:$0xf]
        %v345 = vld [vmem:[%s312 + $0xc] sm:$0xf]
        %v346 = vld [vmem:[%s312 + $0x10] sm:$0xf]
        %v347 = vld [vmem:[%s312 + $0x14] sm:$0xf]
        %v348 = vld [vmem:[%s312 + $0x18] sm:$0xf]
        %v349 = vld [vmem:[%s312 + $0x1c] sm:$0xf]
        %v350 = vld [vmem:[%s1] sm:$0xff]
        %v351 = vld [vmem:[%s1 + $0x8] sm:$0xff]
        %v352 = vld [vmem:[%s1 + $0x10] sm:$0xff]
        %v353 = vld [vmem:[%s1 + $0x18] sm:$0xff]
        %v354 = vld [vmem:[%s1 + $0x20] sm:$0xff]
        %v355 = vld [vmem:[%s1 + $0x28] sm:$0xff]
        %v356 = vld [vmem:[%s1 + $0x30] sm:$0xff]
        %v357 = vld [vmem:[%s1 + $0x38] sm:$0xff]
        %v358 = vld [vmem:[%s1 + $0x40] sm:$0xff]
        %v359 = vld [vmem:[%s1 + $0x48] sm:$0xff]
        %v360 = vld [vmem:[%s1 + $0x50] sm:$0xff]
        %v361 = vld [vmem:[%s1 + $0x58] sm:$0xff]
        %v362 = vld [vmem:[%s1 + $0x60] sm:$0xff]
        %v363 = vld [vmem:[%s1 + $0x68] sm:$0xff]
        %v364 = vld [vmem:[%s1 + $0x70] sm:$0xff]
        %v365 = vld [vmem:[%s1 + $0x78] sm:$0xff]
        %v366 = vld [vmem:[%s2] sm:$0xff]
        %v367 = vld [vmem:[%s2 + $0x8] sm:$0xff]
        %v368 = vld [vmem:[%s2 + $0x10] sm:$0xff]
        %v369 = vld [vmem:[%s2 + $0x18] sm:$0xff]
        %v370 = vlaneseq
        %v371 = vshrl.u32 %v370, 7
        %v372 = vsub.s32 0, %v371
        %v373 = vrot.slane %v342, %v372
        %v374 = vlaneseq
        %v375 = vshrl.u32 %v374, 7
        %v376 = vsub.s32 0, %v375
        %v377 = vrot.slane %v343, %v376
        %v378 = vlaneseq
        %v379 = vshrl.u32 %v378, 7
        %v380 = vsub.s32 0, %v379
        %v381 = vrot.slane %v344, %v380
        %v382 = vlaneseq
        %v383 = vshrl.u32 %v382, 7
        %v384 = vsub.s32 0, %v383
        %v385 = vrot.slane %v345, %v384
        %v386 = vlaneseq
        %v387 = vshrl.u32 %v386, 7
        %v388 = vsub.s32 0, %v387
        %v389 = vrot.slane %v346, %v388
        %v390 = vlaneseq
        %v391 = vshrl.u32 %v390, 7
        %v392 = vsub.s32 0, %v391
        %v393 = vrot.slane %v347, %v392
        %v394 = vlaneseq
        %v395 = vshrl.u32 %v394, 7
        %v396 = vsub.s32 0, %v395
        %v397 = vrot.slane %v348, %v396
        %v398 = vlaneseq
        %v399 = vshrl.u32 %v398, 7
        %v400 = vsub.s32 0, %v399
        %v401 = vrot.slane %v349, %v400
        %403 = vset.pattern.permute.xlu0 0
        %404 = vperm.xlu0 %403, %v350
        %v405 = vpop.permute.xlu0 %404
        %408 = vset.pattern.permute.xlu0 0
        %409 = vperm.xlu0 %408, %v351
        %v410 = vpop.permute.xlu0 %409
        %413 = vset.pattern.permute.xlu0 0
        %414 = vperm.xlu0 %413, %v352
        %v415 = vpop.permute.xlu0 %414
        %418 = vset.pattern.permute.xlu0 0
        %419 = vperm.xlu0 %418, %v353
        %v420 = vpop.permute.xlu0 %419
        %v422 = vmul.f32 %v373, %v405
        %v423 = vmul.f32 %v373, %v410
        %v424 = vmul.f32 %v373, %v415
        %v425 = vmul.f32 %v373, %v420
        %v426 = vmul.f32 %v377, %v405
        %v427 = vmul.f32 %v377, %v410
        %v428 = vmul.f32 %v377, %v415
        %v429 = vmul.f32 %v377, %v420
        %v430 = vmul.f32 %v381, %v405
        %v431 = vmul.f32 %v381, %v410
        %v432 = vmul.f32 %v381, %v415
        %v433 = vmul.f32 %v381, %v420
        %v434 = vmul.f32 %v385, %v405
        %v435 = vmul.f32 %v385, %v410
        %v436 = vmul.f32 %v385, %v415
        %v437 = vmul.f32 %v385, %v420
        %v438 = vmul.f32 %v389, %v405
        %v439 = vmul.f32 %v389, %v410
        %v440 = vmul.f32 %v389, %v415
        %v441 = vmul.f32 %v389, %v420
        %v442 = vmul.f32 %v393, %v405
        %v443 = vmul.f32 %v393, %v410
        %v444 = vmul.f32 %v393, %v415
        %v445 = vmul.f32 %v393, %v420
        %v446 = vmul.f32 %v397, %v405
        %v447 = vmul.f32 %v397, %v410
        %v448 = vmul.f32 %v397, %v415
        %v449 = vmul.f32 %v397, %v420
        %v450 = vmul.f32 %v401, %v405
        %v451 = vmul.f32 %v401, %v410
        %v452 = vmul.f32 %v401, %v415
        %v453 = vmul.f32 %v401, %v420
        %v454 = vlaneseq
        %v455 = vshrl.u32 %v454, 7
        %v456 = vsub.s32 1, %v455
        %v457 = vrot.slane %v342, %v456
        %v458 = vlaneseq
        %v459 = vshrl.u32 %v458, 7
        %v460 = vsub.s32 1, %v459
        %v461 = vrot.slane %v343, %v460
        %v462 = vlaneseq
        %v463 = vshrl.u32 %v462, 7
        %v464 = vsub.s32 1, %v463
        %v465 = vrot.slane %v344, %v464
        %v466 = vlaneseq
        %v467 = vshrl.u32 %v466, 7
        %v468 = vsub.s32 1, %v467
        %v469 = vrot.slane %v345, %v468
        %v470 = vlaneseq
        %v471 = vshrl.u32 %v470, 7
        %v472 = vsub.s32 1, %v471
        %v473 = vrot.slane %v346, %v472
        %v474 = vlaneseq
        %v475 = vshrl.u32 %v474, 7
        %v476 = vsub.s32 1, %v475
        %v477 = vrot.slane %v347, %v476
        %v478 = vlaneseq
        %v479 = vshrl.u32 %v478, 7
        %v480 = vsub.s32 1, %v479
        %v481 = vrot.slane %v348, %v480
        %v482 = vlaneseq
        %v483 = vshrl.u32 %v482, 7
        %v484 = vsub.s32 1, %v483
        %v485 = vrot.slane %v349, %v484
        %487 = vset.pattern.permute.xlu0 0
        %488 = vperm.xlu0 %487, %v354
        %v489 = vpop.permute.xlu0 %488
        %492 = vset.pattern.permute.xlu0 0
        %493 = vperm.xlu0 %492, %v355
        %v494 = vpop.permute.xlu0 %493
        %497 = vset.pattern.permute.xlu0 0
        %498 = vperm.xlu0 %497, %v356
        %v499 = vpop.permute.xlu0 %498
        %502 = vset.pattern.permute.xlu0 0
        %503 = vperm.xlu0 %502, %v357
        %v504 = vpop.permute.xlu0 %503
        %v506 = vmul.f32 %v457, %v489
        %v507 = vmul.f32 %v457, %v494
        %v508 = vmul.f32 %v457, %v499
        %v509 = vmul.f32 %v457, %v504
        %v510 = vmul.f32 %v461, %v489
        %v511 = vmul.f32 %v461, %v494
        %v512 = vmul.f32 %v461, %v499
        %v513 = vmul.f32 %v461, %v504
        %v514 = vmul.f32 %v465, %v489
        %v515 = vmul.f32 %v465, %v494
        %v516 = vmul.f32 %v465, %v499
        %v517 = vmul.f32 %v465, %v504
        %v518 = vmul.f32 %v469, %v489
        %v519 = vmul.f32 %v469, %v494
        %v520 = vmul.f32 %v469, %v499
        %v521 = vmul.f32 %v469, %v504
        %v522 = vmul.f32 %v473, %v489
        %v523 = vmul.f32 %v473, %v494
        %v524 = vmul.f32 %v473, %v499
        %v525 = vmul.f32 %v473, %v504
        %v526 = vmul.f32 %v477, %v489
        %v527 = vmul.f32 %v477, %v494
        %v528 = vmul.f32 %v477, %v499
        %v529 = vmul.f32 %v477, %v504
        %v530 = vmul.f32 %v481, %v489
        %v531 = vmul.f32 %v481, %v494
        %v532 = vmul.f32 %v481, %v499
        %v533 = vmul.f32 %v481, %v504
        %v534 = vmul.f32 %v485, %v489
        %v535 = vmul.f32 %v485, %v494
        %v536 = vmul.f32 %v485, %v499
        %v537 = vmul.f32 %v485, %v504
        %v538 = vadd.f32 %v422, %v506
        %v539 = vadd.f32 %v423, %v507
        %v540 = vadd.f32 %v424, %v508
        %v541 = vadd.f32 %v425, %v509
        %v542 = vadd.f32 %v426, %v510
        %v543 = vadd.f32 %v427, %v511
        %v544 = vadd.f32 %v428, %v512
        %v545 = vadd.f32 %v429, %v513
        %v546 = vadd.f32 %v430, %v514
        %v547 = vadd.f32 %v431, %v515
        %v548 = vadd.f32 %v432, %v516
        %v549 = vadd.f32 %v433, %v517
        %v550 = vadd.f32 %v434, %v518
        %v551 = vadd.f32 %v435, %v519
        %v552 = vadd.f32 %v436, %v520
        %v553 = vadd.f32 %v437, %v521
        %v554 = vadd.f32 %v438, %v522
        %v555 = vadd.f32 %v439, %v523
        %v556 = vadd.f32 %v440, %v524
        %v557 = vadd.f32 %v441, %v525
        %v558 = vadd.f32 %v442, %v526
        %v559 = vadd.f32 %v443, %v527
        %v560 = vadd.f32 %v444, %v528
        %v561 = vadd.f32 %v445, %v529
        %v562 = vadd.f32 %v446, %v530
        %v563 = vadd.f32 %v447, %v531
        %v564 = vadd.f32 %v448, %v532
        %v565 = vadd.f32 %v449, %v533
        %v566 = vadd.f32 %v450, %v534
        %v567 = vadd.f32 %v451, %v535
        %v568 = vadd.f32 %v452, %v536
        %v569 = vadd.f32 %v453, %v537
        %v570 = vlaneseq
        %v571 = vshrl.u32 %v570, 7
        %v572 = vsub.s32 2, %v571
        %v573 = vrot.slane %v342, %v572
        %v574 = vlaneseq
        %v575 = vshrl.u32 %v574, 7
        %v576 = vsub.s32 2, %v575
        %v577 = vrot.slane %v343, %v576
        %v578 = vlaneseq
        %v579 = vshrl.u32 %v578, 7
        %v580 = vsub.s32 2, %v579
        %v581 = vrot.slane %v344, %v580
        %v582 = vlaneseq
        %v583 = vshrl.u32 %v582, 7
        %v584 = vsub.s32 2, %v583
        %v585 = vrot.slane %v345, %v584
        %v586 = vlaneseq
        %v587 = vshrl.u32 %v586, 7
        %v588 = vsub.s32 2, %v587
        %v589 = vrot.slane %v346, %v588
        %v590 = vlaneseq
        %v591 = vshrl.u32 %v590, 7
        %v592 = vsub.s32 2, %v591
        %v593 = vrot.slane %v347, %v592
        %v594 = vlaneseq
        %v595 = vshrl.u32 %v594, 7
        %v596 = vsub.s32 2, %v595
        %v597 = vrot.slane %v348, %v596
        %v598 = vlaneseq
        %v599 = vshrl.u32 %v598, 7
        %v600 = vsub.s32 2, %v599
        %v601 = vrot.slane %v349, %v600
        %603 = vset.pattern.permute.xlu0 0
        %604 = vperm.xlu0 %603, %v358
        %v605 = vpop.permute.xlu0 %604
        %608 = vset.pattern.permute.xlu0 0
        %609 = vperm.xlu0 %608, %v359
        %v610 = vpop.permute.xlu0 %609
        %613 = vset.pattern.permute.xlu0 0
        %614 = vperm.xlu0 %613, %v360
        %v615 = vpop.permute.xlu0 %614
        %618 = vset.pattern.permute.xlu0 0
        %619 = vperm.xlu0 %618, %v361
        %v620 = vpop.permute.xlu0 %619
        %v622 = vmul.f32 %v573, %v605
        %v623 = vmul.f32 %v573, %v610
        %v624 = vmul.f32 %v573, %v615
        %v625 = vmul.f32 %v573, %v620
        %v626 = vmul.f32 %v577, %v605
        %v627 = vmul.f32 %v577, %v610
        %v628 = vmul.f32 %v577, %v615
        %v629 = vmul.f32 %v577, %v620
        %v630 = vmul.f32 %v581, %v605
        %v631 = vmul.f32 %v581, %v610
        %v632 = vmul.f32 %v581, %v615
        %v633 = vmul.f32 %v581, %v620
        %v634 = vmul.f32 %v585, %v605
        %v635 = vmul.f32 %v585, %v610
        %v636 = vmul.f32 %v585, %v615
        %v637 = vmul.f32 %v585, %v620
        %v638 = vmul.f32 %v589, %v605
        %v639 = vmul.f32 %v589, %v610
        %v640 = vmul.f32 %v589, %v615
        %v641 = vmul.f32 %v589, %v620
        %v642 = vmul.f32 %v593, %v605
        %v643 = vmul.f32 %v593, %v610
        %v644 = vmul.f32 %v593, %v615
        %v645 = vmul.f32 %v593, %v620
        %v646 = vmul.f32 %v597, %v605
        %v647 = vmul.f32 %v597, %v610
        %v648 = vmul.f32 %v597, %v615
        %v649 = vmul.f32 %v597, %v620
        %v650 = vmul.f32 %v601, %v605
        %v651 = vmul.f32 %v601, %v610
        %v652 = vmul.f32 %v601, %v615
        %v653 = vmul.f32 %v601, %v620
        %v654 = vadd.f32 %v538, %v622
        %v655 = vadd.f32 %v539, %v623
        %v656 = vadd.f32 %v540, %v624
        %v657 = vadd.f32 %v541, %v625
        %v658 = vadd.f32 %v542, %v626
        %v659 = vadd.f32 %v543, %v627
        %v660 = vadd.f32 %v544, %v628
        %v661 = vadd.f32 %v545, %v629
        %v662 = vadd.f32 %v546, %v630
        %v663 = vadd.f32 %v547, %v631
        %v664 = vadd.f32 %v548, %v632
        %v665 = vadd.f32 %v549, %v633
        %v666 = vadd.f32 %v550, %v634
        %v667 = vadd.f32 %v551, %v635
        %v668 = vadd.f32 %v552, %v636
        %v669 = vadd.f32 %v553, %v637
        %v670 = vadd.f32 %v554, %v638
        %v671 = vadd.f32 %v555, %v639
        %v672 = vadd.f32 %v556, %v640
        %v673 = vadd.f32 %v557, %v641
        %v674 = vadd.f32 %v558, %v642
        %v675 = vadd.f32 %v559, %v643
        %v676 = vadd.f32 %v560, %v644
        %v677 = vadd.f32 %v561, %v645
        %v678 = vadd.f32 %v562, %v646
        %v679 = vadd.f32 %v563, %v647
        %v680 = vadd.f32 %v564, %v648
        %v681 = vadd.f32 %v565, %v649
        %v682 = vadd.f32 %v566, %v650
        %v683 = vadd.f32 %v567, %v651
        %v684 = vadd.f32 %v568, %v652
        %v685 = vadd.f32 %v569, %v653
        %v686 = vlaneseq
        %v687 = vshrl.u32 %v686, 7
        %v688 = vsub.s32 3, %v687
        %v689 = vrot.slane %v342, %v688
        %v690 = vlaneseq
        %v691 = vshrl.u32 %v690, 7
        %v692 = vsub.s32 3, %v691
        %v693 = vrot.slane %v343, %v692
        %v694 = vlaneseq
        %v695 = vshrl.u32 %v694, 7
        %v696 = vsub.s32 3, %v695
        %v697 = vrot.slane %v344, %v696
        %v698 = vlaneseq
        %v699 = vshrl.u32 %v698, 7
        %v700 = vsub.s32 3, %v699
        %v701 = vrot.slane %v345, %v700
        %v702 = vlaneseq
        %v703 = vshrl.u32 %v702, 7
        %v704 = vsub.s32 3, %v703
        %v705 = vrot.slane %v346, %v704
        %v706 = vlaneseq
        %v707 = vshrl.u32 %v706, 7
        %v708 = vsub.s32 3, %v707
        %v709 = vrot.slane %v347, %v708
        %v710 = vlaneseq
        %v711 = vshrl.u32 %v710, 7
        %v712 = vsub.s32 3, %v711
        %v713 = vrot.slane %v348, %v712
        %v714 = vlaneseq
        %v715 = vshrl.u32 %v714, 7
        %v716 = vsub.s32 3, %v715
        %v717 = vrot.slane %v349, %v716
        %719 = vset.pattern.permute.xlu0 0
        %720 = vperm.xlu0 %719, %v362
        %v721 = vpop.permute.xlu0 %720
        %724 = vset.pattern.permute.xlu0 0
        %725 = vperm.xlu0 %724, %v363
        %v726 = vpop.permute.xlu0 %725
        %729 = vset.pattern.permute.xlu0 0
        %730 = vperm.xlu0 %729, %v364
        %v731 = vpop.permute.xlu0 %730
        %734 = vset.pattern.permute.xlu0 0
        %735 = vperm.xlu0 %734, %v365
        %v736 = vpop.permute.xlu0 %735
        %v738 = vmul.f32 %v689, %v721
        %v739 = vmul.f32 %v689, %v726
        %v740 = vmul.f32 %v689, %v731
        %v741 = vmul.f32 %v689, %v736
        %v742 = vmul.f32 %v693, %v721
        %v743 = vmul.f32 %v693, %v726
        %v744 = vmul.f32 %v693, %v731
        %v745 = vmul.f32 %v693, %v736
        %v746 = vmul.f32 %v697, %v721
        %v747 = vmul.f32 %v697, %v726
        %v748 = vmul.f32 %v697, %v731
        %v749 = vmul.f32 %v697, %v736
        %v750 = vmul.f32 %v701, %v721
        %v751 = vmul.f32 %v701, %v726
        %v752 = vmul.f32 %v701, %v731
        %v753 = vmul.f32 %v701, %v736
        %v754 = vmul.f32 %v705, %v721
        %v755 = vmul.f32 %v705, %v726
        %v756 = vmul.f32 %v705, %v731
        %v757 = vmul.f32 %v705, %v736
        %v758 = vmul.f32 %v709, %v721
        %v759 = vmul.f32 %v709, %v726
        %v760 = vmul.f32 %v709, %v731
        %v761 = vmul.f32 %v709, %v736
        %v762 = vmul.f32 %v713, %v721
        %v763 = vmul.f32 %v713, %v726
        %v764 = vmul.f32 %v713, %v731
        %v765 = vmul.f32 %v713, %v736
        %v766 = vmul.f32 %v717, %v721
        %v767 = vmul.f32 %v717, %v726
        %v768 = vmul.f32 %v717, %v731
        %v769 = vmul.f32 %v717, %v736
        %v770 = vadd.f32 %v654, %v738
        %v771 = vadd.f32 %v655, %v739
        %v772 = vadd.f32 %v656, %v740
        %v773 = vadd.f32 %v657, %v741
        %v774 = vadd.f32 %v658, %v742
        %v775 = vadd.f32 %v659, %v743
        %v776 = vadd.f32 %v660, %v744
        %v777 = vadd.f32 %v661, %v745
        %v778 = vadd.f32 %v662, %v746
        %v779 = vadd.f32 %v663, %v747
        %v780 = vadd.f32 %v664, %v748
        %v781 = vadd.f32 %v665, %v749
        %v782 = vadd.f32 %v666, %v750
        %v783 = vadd.f32 %v667, %v751
        %v784 = vadd.f32 %v668, %v752
        %v785 = vadd.f32 %v669, %v753
        %v786 = vadd.f32 %v670, %v754
        %v787 = vadd.f32 %v671, %v755
        %v788 = vadd.f32 %v672, %v756
        %v789 = vadd.f32 %v673, %v757
        %v790 = vadd.f32 %v674, %v758
        %v791 = vadd.f32 %v675, %v759
        %v792 = vadd.f32 %v676, %v760
        %v793 = vadd.f32 %v677, %v761
        %v794 = vadd.f32 %v678, %v762
        %v795 = vadd.f32 %v679, %v763
        %v796 = vadd.f32 %v680, %v764
        %v797 = vadd.f32 %v681, %v765
        %v798 = vadd.f32 %v682, %v766
        %v799 = vadd.f32 %v683, %v767
        %v800 = vadd.f32 %v684, %v768
        %v801 = vadd.f32 %v685, %v769
        %803 = vset.pattern.permute.xlu0 0
        %804 = vperm.xlu0 %803, %v366
        %v805 = vpop.permute.xlu0 %804
        %808 = vset.pattern.permute.xlu0 0
        %809 = vperm.xlu0 %808, %v367
        %v810 = vpop.permute.xlu0 %809
        %813 = vset.pattern.permute.xlu0 0
        %814 = vperm.xlu0 %813, %v368
        %v815 = vpop.permute.xlu0 %814
        %818 = vset.pattern.permute.xlu0 0
        %819 = vperm.xlu0 %818, %v369
        %v820 = vpop.permute.xlu0 %819
        %v822 = vadd.f32 %v770, %v805
        %v823 = vadd.f32 %v771, %v810
        %v824 = vadd.f32 %v772, %v815
        %v825 = vadd.f32 %v773, %v820
        %v826 = vadd.f32 %v774, %v805
        %v827 = vadd.f32 %v775, %v810
        %v828 = vadd.f32 %v776, %v815
        %v829 = vadd.f32 %v777, %v820
        %v830 = vadd.f32 %v778, %v805
        %v831 = vadd.f32 %v779, %v810
        %v832 = vadd.f32 %v780, %v815
        %v833 = vadd.f32 %v781, %v820
        %v834 = vadd.f32 %v782, %v805
        %v835 = vadd.f32 %v783, %v810
        %v836 = vadd.f32 %v784, %v815
        %v837 = vadd.f32 %v785, %v820
        %v838 = vadd.f32 %v786, %v805
        %v839 = vadd.f32 %v787, %v810
        %v840 = vadd.f32 %v788, %v815
        %v841 = vadd.f32 %v789, %v820
        %v842 = vadd.f32 %v790, %v805
        %v843 = vadd.f32 %v791, %v810
        %v844 = vadd.f32 %v792, %v815
        %v845 = vadd.f32 %v793, %v820
        %v846 = vadd.f32 %v794, %v805
        %v847 = vadd.f32 %v795, %v810
        %v848 = vadd.f32 %v796, %v815
        %v849 = vadd.f32 %v797, %v820
        %v850 = vadd.f32 %v798, %v805
        %v851 = vadd.f32 %v799, %v810
        %v852 = vadd.f32 %v800, %v815
        %v853 = vadd.f32 %v801, %v820
        %v854 = vmax.f32 %v822, 0.0
        %v855 = vmax.f32 %v823, 0.0
        %v856 = vmax.f32 %v824, 0.0
        %v857 = vmax.f32 %v825, 0.0
        %v858 = vmax.f32 %v826, 0.0
        %v859 = vmax.f32 %v827, 0.0
        %v860 = vmax.f32 %v828, 0.0
        %v861 = vmax.f32 %v829, 0.0
        %v862 = vmax.f32 %v830, 0.0
        %v863 = vmax.f32 %v831, 0.0
        %v864 = vmax.f32 %v832, 0.0
        %v865 = vmax.f32 %v833, 0.0
        %v866 = vmax.f32 %v834, 0.0
        %v867 = vmax.f32 %v835, 0.0
        %v868 = vmax.f32 %v836, 0.0
        %v869 = vmax.f32 %v837, 0.0
        %v870 = vmax.f32 %v838, 0.0
        %v871 = vmax.f32 %v839, 0.0
        %v872 = vmax.f32 %v840, 0.0
        %v873 = vmax.f32 %v841, 0.0
        %v874 = vmax.f32 %v842, 0.0
        %v875 = vmax.f32 %v843, 0.0
        %v876 = vmax.f32 %v844, 0.0
        %v877 = vmax.f32 %v845, 0.0
        %v878 = vmax.f32 %v846, 0.0
        %v879 = vmax.f32 %v847, 0.0
        %v880 = vmax.f32 %v848, 0.0
        %v881 = vmax.f32 %v849, 0.0
        %v882 = vmax.f32 %v850, 0.0
        %v883 = vmax.f32 %v851, 0.0
        %v884 = vmax.f32 %v852, 0.0
        %v885 = vmax.f32 %v853, 0.0
        %v886 = vld [vmem:[#allocation2] sm:$0xff]
        %887 = vadd.xlane.f32.xlu0 %v854
        %v888 = vpop.xlane.xlu0 %887
        %889 = vadd.xlane.f32.xlu0 %v855
        %v890 = vpop.xlane.xlu0 %889
        %891 = vadd.xlane.f32.xlu0 %v856
        %v892 = vpop.xlane.xlu0 %891
        %893 = vadd.xlane.f32.xlu0 %v857
        %v894 = vpop.xlane.xlu0 %893
        %895 = vadd.xlane.f32.xlu0 %v858
        %v896 = vpop.xlane.xlu0 %895
        %897 = vadd.xlane.f32.xlu0 %v859
        %v898 = vpop.xlane.xlu0 %897
        %899 = vadd.xlane.f32.xlu0 %v860
        %v900 = vpop.xlane.xlu0 %899
        %901 = vadd.xlane.f32.xlu0 %v861
        %v902 = vpop.xlane.xlu0 %901
        %903 = vadd.xlane.f32.xlu0 %v862
        %v904 = vpop.xlane.xlu0 %903
        %905 = vadd.xlane.f32.xlu0 %v863
        %v906 = vpop.xlane.xlu0 %905
        %907 = vadd.xlane.f32.xlu0 %v864
        %v908 = vpop.xlane.xlu0 %907
        %909 = vadd.xlane.f32.xlu0 %v865
        %v910 = vpop.xlane.xlu0 %909
        %911 = vadd.xlane.f32.xlu0 %v866
        %v912 = vpop.xlane.xlu0 %911
        %913 = vadd.xlane.f32.xlu0 %v867
        %v914 = vpop.xlane.xlu0 %913
        %915 = vadd.xlane.f32.xlu0 %v868
        %v916 = vpop.xlane.xlu0 %915
        %917 = vadd.xlane.f32.xlu0 %v869
        %v918 = vpop.xlane.xlu0 %917
        %919 = vadd.xlane.f32.xlu0 %v870
        %v920 = vpop.xlane.xlu0 %919
        %921 = vadd.xlane.f32.xlu0 %v871
        %v922 = vpop.xlane.xlu0 %921
        %923 = vadd.xlane.f32.xlu0 %v872
        %v924 = vpop.xlane.xlu0 %923
        %925 = vadd.xlane.f32.xlu0 %v873
        %v926 = vpop.xlane.xlu0 %925
        %927 = vadd.xlane.f32.xlu0 %v874
        %v928 = vpop.xlane.xlu0 %927
        %929 = vadd.xlane.f32.xlu0 %v875
        %v930 = vpop.xlane.xlu0 %929
        %931 = vadd.xlane.f32.xlu0 %v876
        %v932 = vpop.xlane.xlu0 %931
        %933 = vadd.xlane.f32.xlu0 %v877
        %v934 = vpop.xlane.xlu0 %933
        %935 = vadd.xlane.f32.xlu0 %v878
        %v936 = vpop.xlane.xlu0 %935
        %937 = vadd.xlane.f32.xlu0 %v879
        %v938 = vpop.xlane.xlu0 %937
        %939 = vadd.xlane.f32.xlu0 %v880
        %v940 = vpop.xlane.xlu0 %939
        %941 = vadd.xlane.f32.xlu0 %v881
        %v942 = vpop.xlane.xlu0 %941
        %943 = vadd.xlane.f32.xlu0 %v882
        %v944 = vpop.xlane.xlu0 %943
        %945 = vadd.xlane.f32.xlu0 %v883
        %v946 = vpop.xlane.xlu0 %945
        %947 = vadd.xlane.f32.xlu0 %v884
        %v948 = vpop.xlane.xlu0 %947
        %949 = vadd.xlane.f32.xlu0 %v885
        %v950 = vpop.xlane.xlu0 %949
        %v983 = vlaneseq
        %v984 = vand.u32 %v983, 127
        %v985 = vlaneseq
        %v986 = vshrl.u32 %v985, 7
        %v987 = vsub.s32 %v984, %v986
        %v988 = vrot.slane %v888, %v987
        %v989 = vadd.s32 %v984, 4294967288
        %v990 = vlaneseq
        %v991 = vshrl.u32 %v990, 7
        %v992 = vsub.s32 %v989, %v991
        %v993 = vrot.slane %v890, %v992
        %vm994 = vcmask 130112
        %v995 = vsel %vm994, %v993, %v988
        %v996 = vadd.s32 %v984, 4294967280
        %v997 = vlaneseq
        %v998 = vshrl.u32 %v997, 7
        %v999 = vsub.s32 %v996, %v998
        %v1000 = vrot.slane %v892, %v999
        %vm1001 = vcmask 195712
        %v1002 = vsel %vm1001, %v1000, %v995
        %v1003 = vadd.s32 %v984, 4294967272
        %v1004 = vlaneseq
        %v1005 = vshrl.u32 %v1004, 7
        %v1006 = vsub.s32 %v1003, %v1005
        %v1007 = vrot.slane %v894, %v1006
        %vm1008 = vcmask 261312
        %v1009 = vsel %vm1008, %v1007, %v1002
        %v1010 = vlaneseq
        %v1011 = vshrl.u32 %v1010, 7
        %v1012 = vsub.s32 %v984, %v1011
        %v1013 = vrot.slane %v896, %v1012
        %v1014 = vlaneseq
        %v1015 = vshrl.u32 %v1014, 7
        %v1016 = vsub.s32 %v989, %v1015
        %v1017 = vrot.slane %v898, %v1016
        %v1018 = vsel %vm994, %v1017, %v1013
        %v1019 = vlaneseq
        %v1020 = vshrl.u32 %v1019, 7
        %v1021 = vsub.s32 %v996, %v1020
        %v1022 = vrot.slane %v900, %v1021
        %v1023 = vsel %vm1001, %v1022, %v1018
        %v1024 = vlaneseq
        %v1025 = vshrl.u32 %v1024, 7
        %v1026 = vsub.s32 %v1003, %v1025
        %v1027 = vrot.slane %v902, %v1026
        %v1028 = vsel %vm1008, %v1027, %v1023
        %v1029 = vlaneseq
        %v1030 = vshrl.u32 %v1029, 7
        %v1031 = vsub.s32 %v984, %v1030
        %v1032 = vrot.slane %v904, %v1031
        %v1033 = vlaneseq
        %v1034 = vshrl.u32 %v1033, 7
        %v1035 = vsub.s32 %v989, %v1034
        %v1036 = vrot.slane %v906, %v1035
        %v1037 = vsel %vm994, %v1036, %v1032
        %v1038 = vlaneseq
        %v1039 = vshrl.u32 %v1038, 7
        %v1040 = vsub.s32 %v996, %v1039
        %v1041 = vrot.slane %v908, %v1040
        %v1042 = vsel %vm1001, %v1041, %v1037
        %v1043 = vlaneseq
        %v1044 = vshrl.u32 %v1043, 7
        %v1045 = vsub.s32 %v1003, %v1044
        %v1046 = vrot.slane %v910, %v1045
        %v1047 = vsel %vm1008, %v1046, %v1042
        %v1048 = vlaneseq
        %v1049 = vshrl.u32 %v1048, 7
        %v1050 = vsub.s32 %v984, %v1049
        %v1051 = vrot.slane %v912, %v1050
        %v1052 = vlaneseq
        %v1053 = vshrl.u32 %v1052, 7
        %v1054 = vsub.s32 %v989, %v1053
        %v1055 = vrot.slane %v914, %v1054
        %v1056 = vsel %vm994, %v1055, %v1051
        %v1057 = vlaneseq
        %v1058 = vshrl.u32 %v1057, 7
        %v1059 = vsub.s32 %v996, %v1058
        %v1060 = vrot.slane %v916, %v1059
        %v1061 = vsel %vm1001, %v1060, %v1056
        %v1062 = vlaneseq
        %v1063 = vshrl.u32 %v1062, 7
        %v1064 = vsub.s32 %v1003, %v1063
        %v1065 = vrot.slane %v918, %v1064
        %v1066 = vsel %vm1008, %v1065, %v1061
        %v1067 = vlaneseq
        %v1068 = vshrl.u32 %v1067, 7
        %v1069 = vsub.s32 %v984, %v1068
        %v1070 = vrot.slane %v920, %v1069
        %v1071 = vlaneseq
        %v1072 = vshrl.u32 %v1071, 7
        %v1073 = vsub.s32 %v989, %v1072
        %v1074 = vrot.slane %v922, %v1073
        %v1075 = vsel %vm994, %v1074, %v1070
        %v1076 = vlaneseq
        %v1077 = vshrl.u32 %v1076, 7
        %v1078 = vsub.s32 %v996, %v1077
        %v1079 = vrot.slane %v924, %v1078
        %v1080 = vsel %vm1001, %v1079, %v1075
        %v1081 = vlaneseq
        %v1082 = vshrl.u32 %v1081, 7
        %v1083 = vsub.s32 %v1003, %v1082
        %v1084 = vrot.slane %v926, %v1083
        %v1085 = vsel %vm1008, %v1084, %v1080
        %v1086 = vlaneseq
        %v1087 = vshrl.u32 %v1086, 7
        %v1088 = vsub.s32 %v984, %v1087
        %v1089 = vrot.slane %v928, %v1088
        %v1090 = vlaneseq
        %v1091 = vshrl.u32 %v1090, 7
        %v1092 = vsub.s32 %v989, %v1091
        %v1093 = vrot.slane %v930, %v1092
        %v1094 = vsel %vm994, %v1093, %v1089
        %v1095 = vlaneseq
        %v1096 = vshrl.u32 %v1095, 7
        %v1097 = vsub.s32 %v996, %v1096
        %v1098 = vrot.slane %v932, %v1097
        %v1099 = vsel %vm1001, %v1098, %v1094
        %v1100 = vlaneseq
        %v1101 = vshrl.u32 %v1100, 7
        %v1102 = vsub.s32 %v1003, %v1101
        %v1103 = vrot.slane %v934, %v1102
        %v1104 = vsel %vm1008, %v1103, %v1099
        %v1105 = vlaneseq
        %v1106 = vshrl.u32 %v1105, 7
        %v1107 = vsub.s32 %v984, %v1106
        %v1108 = vrot.slane %v936, %v1107
        %v1109 = vlaneseq
        %v1110 = vshrl.u32 %v1109, 7
        %v1111 = vsub.s32 %v989, %v1110
        %v1112 = vrot.slane %v938, %v1111
        %v1113 = vsel %vm994, %v1112, %v1108
        %v1114 = vlaneseq
        %v1115 = vshrl.u32 %v1114, 7
        %v1116 = vsub.s32 %v996, %v1115
        %v1117 = vrot.slane %v940, %v1116
        %v1118 = vsel %vm1001, %v1117, %v1113
        %v1119 = vlaneseq
        %v1120 = vshrl.u32 %v1119, 7
        %v1121 = vsub.s32 %v1003, %v1120
        %v1122 = vrot.slane %v942, %v1121
        %v1123 = vsel %vm1008, %v1122, %v1118
        %v1124 = vlaneseq
        %v1125 = vshrl.u32 %v1124, 7
        %v1126 = vsub.s32 %v984, %v1125
        %v1127 = vrot.slane %v944, %v1126
        %v1128 = vlaneseq
        %v1129 = vshrl.u32 %v1128, 7
        %v1130 = vsub.s32 %v989, %v1129
        %v1131 = vrot.slane %v946, %v1130
        %v1132 = vsel %vm994, %v1131, %v1127
        %v1133 = vlaneseq
        %v1134 = vshrl.u32 %v1133, 7
        %v1135 = vsub.s32 %v996, %v1134
        %v1136 = vrot.slane %v948, %v1135
        %v1137 = vsel %vm1001, %v1136, %v1132
        %v1138 = vlaneseq
        %v1139 = vshrl.u32 %v1138, 7
        %v1140 = vsub.s32 %v1003, %v1139
        %v1141 = vrot.slane %v950, %v1140
        %v1142 = vsel %vm1008, %v1141, %v1137
        %vm1143 = vcmask 1041409
        %v1144 = vsel %vm1143, %v1028, %v1009
        %vm1145 = vcmask 1042434
        %v1146 = vsel %vm1145, %v1047, %v1144
        %vm1147 = vcmask 1043459
        %v1148 = vsel %vm1147, %v1066, %v1146
        %vm1149 = vcmask 1044484
        %v1150 = vsel %vm1149, %v1085, %v1148
        %vm1151 = vcmask 1045509
        %v1152 = vsel %vm1151, %v1104, %v1150
        %vm1153 = vcmask 1046534
        %v1154 = vsel %vm1153, %v1123, %v1152
        %vm1155 = vcmask 1047559
        %v1156 = vsel %vm1155, %v1142, %v1154
        %v1158 = vadd.f32 %v886, %v1156
        %vm1159 = vcmask 261120
        %1160 = vst.msk [vmem:[#allocation2] sm:$0xff] %vm1159, %v1158
        %p1161 = scmp.eq.s32.totalorder %s19, 1
        // Predicated region
        $region94: #{tpu_custom_call.1} parent=84 // pred_check
          %p1162 = pneg %p1161
        $region95: #{tpu_custom_call.1} parent=84 // pred_check_branch
          %1164 = sbr.rel (%p1162) target = $region97
        $region96: #{tpu_custom_call.1} parent=84 // pred_region
          %v1165 = vld [vmem:[#allocation2] sm:$0xff]
          %v1166 = vmul.f32 %v1165, 0.00390625
          %v1167 = vld [vmem:[%s3] sm:$0xff]
          %v1168 = vld [vmem:[%s3 + $0x8] sm:$0xff]
          %v1169 = vld [vmem:[%s3 + $0x10] sm:$0xff]
          %v1170 = vld [vmem:[%s3 + $0x18] sm:$0xff]
          %v1171 = vld [vmem:[%s4] sm:$0x1]
          %v1173 = vlaneseq
          %v1174 = vshrl.u32 %v1173, 7
          %v1175 = vsub.s32 0, %v1174
          %v1176 = vrot.slane %v1171, %v1175
          %v1179 = vsel %vm1159, %v1166, 0
          %1181 = vmatprep.subr.mxu0 0.0
          %1182 = vmatpush1.msra.mxu0 0.0
          %1183 = vmatprep.subr.mxu0 0.0
          %1184 = vmatpush1.msra.mxu0 0.0
          %1185 = vmatprep.subr.mxu0 0.0
          %1186 = vmatpush1.msra.mxu0 0.0
          %1187 = vmatprep.subr.mxu0 0.0
          %1188 = vmatpush1.msra.mxu0 0.0
          %1189 = vmatprep.subr.mxu0 0.0
          %1190 = vmatpush1.msra.mxu0 0.0
          %1191 = vmatprep.subr.mxu0 0.0
          %1192 = vmatpush1.msra.mxu0 0.0
          %1193 = vmatprep.subr.mxu0 0.0
          %1194 = vmatpush1.msra.mxu0 0.0
          %1195 = vmatprep.subr.mxu0 0.0
          %1196 = vmatpush1.msra.mxu0 0.0
          %1197 = vmatprep.subr.mxu0 0.0
          %1198 = vmatpush1.msra.mxu0 0.0
          %1199 = vmatprep.subr.mxu0 0.0
          %1200 = vmatpush1.msra.mxu0 0.0
          %1201 = vmatprep.subr.mxu0 0.0
          %1202 = vmatpush1.msra.mxu0 0.0
          %1203 = vmatprep.subr.mxu0 0.0
          %1204 = vmatpush1.msra.mxu0 0.0
          %1205 = vmatprep.subr.mxu0 0.0
          %v1206 = vand.u32 %v1170, 4294901760
          %1207 = vmatpush1.msra.mxu0 %v1206
          %1208 = vmatprep.subr.mxu0 0.0
          %v1209 = vand.u32 %v1169, 4294901760
          %1210 = vmatpush1.msra.mxu0 %v1209
          %1211 = vmatprep.subr.mxu0 0.0
          %v1212 = vand.u32 %v1168, 4294901760
          %1213 = vmatpush1.msra.mxu0 %v1212
          %1214 = vmatprep.subr.mxu0 0.0
          %v1215 = vand.u32 %v1167, 4294901760
          %1216 = vmatpush1.msra.mxu0 %v1215
          %1217 = vmatprep.subr.mxu0 0.0
          %1218 = vmatpush2.msra.mxu0 0.0
          %1219 = vmatprep.subr.mxu0 0.0
          %1220 = vmatpush2.msra.mxu0 0.0
          %1221 = vmatprep.subr.mxu0 0.0
          %1222 = vmatpush2.msra.mxu0 0.0
          %1223 = vmatprep.subr.mxu0 0.0
          %1224 = vmatpush2.msra.mxu0 0.0
          %1225 = vmatprep.subr.mxu0 0.0
          %1226 = vmatpush2.msra.mxu0 0.0
          %1227 = vmatprep.subr.mxu0 0.0
          %1228 = vmatpush2.msra.mxu0 0.0
          %1229 = vmatprep.subr.mxu0 0.0
          %1230 = vmatpush2.msra.mxu0 0.0
          %1231 = vmatprep.subr.mxu0 0.0
          %1232 = vmatpush2.msra.mxu0 0.0
          %1233 = vmatprep.subr.mxu0 0.0
          %1234 = vmatpush2.msra.mxu0 0.0
          %1235 = vmatprep.subr.mxu0 0.0
          %1236 = vmatpush2.msra.mxu0 0.0
          %1237 = vmatprep.subr.mxu0 0.0
          %1238 = vmatpush2.msra.mxu0 0.0
          %1239 = vmatprep.subr.mxu0 0.0
          %1240 = vmatpush2.msra.mxu0 0.0
          %1241 = vmatprep.subr.mxu0 0.0
          %1242 = vmatpush2.msra.mxu0 0.0
          %1243 = vmatprep.subr.mxu0 0.0
          %1244 = vmatpush2.msra.mxu0 0.0
          %1245 = vmatprep.subr.mxu0 0.0
          %1246 = vmatpush2.msra.mxu0 0.0
          %1247 = vmatprep.subr.mxu0 0.0
          %1248 = vmatpush2.msra.mxu0 0.0
          %1249 = vmatprep.mubr.f32.mxu0 0.0
          %v1250 = vand.u32 %v1179, 4294901760
          %v1251 = vsub.f32 %v1179, %v1250
          %v1252 = vand.u32 %v1251, 4294901760
          %v1253 = vsub.f32 %v1251, %v1252
          %v1254 = vand.u32 %v1253, 4294901760
          %1255 = vmatmul.mubr.f32.gmra.mxu0 %v1254
          %v1256 = vpop.f32.mrf.mxu0
          %v1257 = vadd.f32 %v1176, %v1256
          %v1258 = vpop.f32.mrf.mxu0
          %1259 = vdwg.mxu0
          %1260 = vmatprep.subr.mxu0 0.0
          %1261 = vmatpush1.msra.mxu0 0.0
          %1262 = vmatprep.subr.mxu0 0.0
          %1263 = vmatpush1.msra.mxu0 0.0
          %1264 = vmatprep.subr.mxu0 0.0
          %1265 = vmatpush1.msra.mxu0 0.0
          %1266 = vmatprep.subr.mxu0 0.0
          %1267 = vmatpush1.msra.mxu0 0.0
          %1268 = vmatprep.subr.mxu0 0.0
          %1269 = vmatpush1.msra.mxu0 0.0
          %1270 = vmatprep.subr.mxu0 0.0
          %1271 = vmatpush1.msra.mxu0 0.0
          %1272 = vmatprep.subr.mxu0 0.0
          %1273 = vmatpush1.msra.mxu0 0.0
          %1274 = vmatprep.subr.mxu0 0.0
          %1275 = vmatpush1.msra.mxu0 0.0
          %1276 = vmatprep.subr.mxu0 0.0
          %1277 = vmatpush1.msra.mxu0 0.0
          %1278 = vmatprep.subr.mxu0 0.0
          %1279 = vmatpush1.msra.mxu0 0.0
          %1280 = vmatprep.subr.mxu0 0.0
          %1281 = vmatpush1.msra.mxu0 0.0
          %1282 = vmatprep.subr.mxu0 0.0
          %1283 = vmatpush1.msra.mxu0 0.0
          %1284 = vmatprep.subr.mxu0 0.0
          %v1285 = vand.u32 %v1170, 4294901760
          %v1286 = vsub.f32 %v1170, %v1285
          %v1287 = vand.u32 %v1286, 4294901760
          %v1288 = vsub.f32 %v1286, %v1287
          %v1289 = vand.u32 %v1288, 4294901760
          %1290 = vmatpush1.msra.mxu0 %v1289
          %1291 = vmatprep.subr.mxu0 0.0
          %v1292 = vand.u32 %v1169, 4294901760
          %v1293 = vsub.f32 %v1169, %v1292
          %v1294 = vand.u32 %v1293, 4294901760
          %v1295 = vsub.f32 %v1293, %v1294
          %v1296 = vand.u32 %v1295, 4294901760
          %1297 = vmatpush1.msra.mxu0 %v1296
          %1298 = vmatprep.subr.mxu0 0.0
          %v1299 = vand.u32 %v1168, 4294901760
          %v1300 = vsub.f32 %v1168, %v1299
          %v1301 = vand.u32 %v1300, 4294901760
          %v1302 = vsub.f32 %v1300, %v1301
          %v1303 = vand.u32 %v1302, 4294901760
          %1304 = vmatpush1.msra.mxu0 %v1303
          %1305 = vmatprep.subr.mxu0 0.0
          %v1306 = vand.u32 %v1167, 4294901760
          %v1307 = vsub.f32 %v1167, %v1306
          %v1308 = vand.u32 %v1307, 4294901760
          %v1309 = vsub.f32 %v1307, %v1308
          %v1310 = vand.u32 %v1309, 4294901760
          %1311 = vmatpush1.msra.mxu0 %v1310
          %1312 = vmatprep.subr.mxu0 0.0
          %1313 = vmatpush2.msra.mxu0 0.0
          %1314 = vmatprep.subr.mxu0 0.0
          %1315 = vmatpush2.msra.mxu0 0.0
          %1316 = vmatprep.subr.mxu0 0.0
          %1317 = vmatpush2.msra.mxu0 0.0
          %1318 = vmatprep.subr.mxu0 0.0
          %1319 = vmatpush2.msra.mxu0 0.0
          %1320 = vmatprep.subr.mxu0 0.0
          %1321 = vmatpush2.msra.mxu0 0.0
          %1322 = vmatprep.subr.mxu0 0.0
          %1323 = vmatpush2.msra.mxu0 0.0
          %1324 = vmatprep.subr.mxu0 0.0
          %1325 = vmatpush2.msra.mxu0 0.0
          %1326 = vmatprep.subr.mxu0 0.0
          %1327 = vmatpush2.msra.mxu0 0.0
          %1328 = vmatprep.subr.mxu0 0.0
          %1329 = vmatpush2.msra.mxu0 0.0
          %1330 = vmatprep.subr.mxu0 0.0
          %1331 = vmatpush2.msra.mxu0 0.0
          %1332 = vmatprep.subr.mxu0 0.0
          %1333 = vmatpush2.msra.mxu0 0.0
          %1334 = vmatprep.subr.mxu0 0.0
          %1335 = vmatpush2.msra.mxu0 0.0
          %1336 = vmatprep.subr.mxu0 0.0
          %1337 = vmatpush2.msra.mxu0 0.0
          %1338 = vmatprep.subr.mxu0 0.0
          %1339 = vmatpush2.msra.mxu0 0.0
          %1340 = vmatprep.subr.mxu0 0.0
          %1341 = vmatpush2.msra.mxu0 0.0
          %1342 = vmatprep.subr.mxu0 0.0
          %1343 = vmatpush2.msra.mxu0 0.0
          %1344 = vmatprep.mubr.f32.mxu0 0.0
          %v1345 = vand.u32 %v1179, 4294901760
          %1346 = vmatmul.mubr.f32.gmra.mxu0 %v1345
          %v1347 = vpop.f32.mrf.mxu0
          %v1348 = vadd.f32 %v1257, %v1347
          %v1349 = vpop.f32.mrf.mxu0
          %1350 = vdwg.mxu0
          %1351 = vmatprep.subr.mxu0 0.0
          %1352 = vmatpush1.msra.mxu0 0.0
          %1353 = vmatprep.subr.mxu0 0.0
          %1354 = vmatpush1.msra.mxu0 0.0
          %1355 = vmatprep.subr.mxu0 0.0
          %1356 = vmatpush1.msra.mxu0 0.0
          %1357 = vmatprep.subr.mxu0 0.0
          %1358 = vmatpush1.msra.mxu0 0.0
          %1359 = vmatprep.subr.mxu0 0.0
          %1360 = vmatpush1.msra.mxu0 0.0
          %1361 = vmatprep.subr.mxu0 0.0
          %1362 = vmatpush1.msra.mxu0 0.0
          %1363 = vmatprep.subr.mxu0 0.0
          %1364 = vmatpush1.msra.mxu0 0.0
          %1365 = vmatprep.subr.mxu0 0.0
          %1366 = vmatpush1.msra.mxu0 0.0
          %1367 = vmatprep.subr.mxu0 0.0
          %1368 = vmatpush1.msra.mxu0 0.0
          %1369 = vmatprep.subr.mxu0 0.0
          %1370 = vmatpush1.msra.mxu0 0.0
          %1371 = vmatprep.subr.mxu0 0.0
          %1372 = vmatpush1.msra.mxu0 0.0
          %1373 = vmatprep.subr.mxu0 0.0
          %1374 = vmatpush1.msra.mxu0 0.0
          %1375 = vmatprep.subr.mxu0 0.0
          %v1376 = vand.u32 %v1170, 4294901760
          %v1377 = vsub.f32 %v1170, %v1376
          %1378 = vmatpush1.msra.mxu0 %v1377
          %1379 = vmatprep.subr.mxu0 0.0
          %v1380 = vand.u32 %v1169, 4294901760
          %v1381 = vsub.f32 %v1169, %v1380
          %1382 = vmatpush1.msra.mxu0 %v1381
          %1383 = vmatprep.subr.mxu0 0.0
          %v1384 = vand.u32 %v1168, 4294901760
          %v1385 = vsub.f32 %v1168, %v1384
          %1386 = vmatpush1.msra.mxu0 %v1385
          %1387 = vmatprep.subr.mxu0 0.0
          %v1388 = vand.u32 %v1167, 4294901760
          %v1389 = vsub.f32 %v1167, %v1388
          %1390 = vmatpush1.msra.mxu0 %v1389
          %1391 = vmatprep.subr.mxu0 0.0
          %1392 = vmatpush2.msra.mxu0 0.0
          %1393 = vmatprep.subr.mxu0 0.0
          %1394 = vmatpush2.msra.mxu0 0.0
          %1395 = vmatprep.subr.mxu0 0.0
          %1396 = vmatpush2.msra.mxu0 0.0
          %1397 = vmatprep.subr.mxu0 0.0
          %1398 = vmatpush2.msra.mxu0 0.0
          %1399 = vmatprep.subr.mxu0 0.0
          %1400 = vmatpush2.msra.mxu0 0.0
          %1401 = vmatprep.subr.mxu0 0.0
          %1402 = vmatpush2.msra.mxu0 0.0
          %1403 = vmatprep.subr.mxu0 0.0
          %1404 = vmatpush2.msra.mxu0 0.0
          %1405 = vmatprep.subr.mxu0 0.0
          %1406 = vmatpush2.msra.mxu0 0.0
          %1407 = vmatprep.subr.mxu0 0.0
          %1408 = vmatpush2.msra.mxu0 0.0
          %1409 = vmatprep.subr.mxu0 0.0
          %1410 = vmatpush2.msra.mxu0 0.0
          %1411 = vmatprep.subr.mxu0 0.0
          %1412 = vmatpush2.msra.mxu0 0.0
          %1413 = vmatprep.subr.mxu0 0.0
          %1414 = vmatpush2.msra.mxu0 0.0
          %1415 = vmatprep.subr.mxu0 0.0
          %1416 = vmatpush2.msra.mxu0 0.0
          %1417 = vmatprep.subr.mxu0 0.0
          %1418 = vmatpush2.msra.mxu0 0.0
          %1419 = vmatprep.subr.mxu0 0.0
          %1420 = vmatpush2.msra.mxu0 0.0
          %1421 = vmatprep.subr.mxu0 0.0
          %1422 = vmatpush2.msra.mxu0 0.0
          %1423 = vmatprep.mubr.f32.mxu0 0.0
          %v1424 = vand.u32 %v1179, 4294901760
          %v1425 = vsub.f32 %v1179, %v1424
          %1426 = vmatmul.mubr.f32.gmra.mxu0 %v1425
          %v1427 = vpop.f32.mrf.mxu0
          %v1428 = vadd.f32 %v1348, %v1427
          %v1429 = vpop.f32.mrf.mxu0
          %1430 = vdwg.mxu0
          %1431 = vmatprep.subr.mxu0 0.0
          %1432 = vmatpush1.msra.mxu0 0.0
          %1433 = vmatprep.subr.mxu0 0.0
          %1434 = vmatpush1.msra.mxu0 0.0
          %1435 = vmatprep.subr.mxu0 0.0
          %1436 = vmatpush1.msra.mxu0 0.0
          %1437 = vmatprep.subr.mxu0 0.0
          %1438 = vmatpush1.msra.mxu0 0.0
          %1439 = vmatprep.subr.mxu0 0.0
          %1440 = vmatpush1.msra.mxu0 0.0
          %1441 = vmatprep.subr.mxu0 0.0
          %1442 = vmatpush1.msra.mxu0 0.0
          %1443 = vmatprep.subr.mxu0 0.0
          %1444 = vmatpush1.msra.mxu0 0.0
          %1445 = vmatprep.subr.mxu0 0.0
          %1446 = vmatpush1.msra.mxu0 0.0
          %1447 = vmatprep.subr.mxu0 0.0
          %1448 = vmatpush1.msra.mxu0 0.0
          %1449 = vmatprep.subr.mxu0 0.0
          %1450 = vmatpush1.msra.mxu0 0.0
          %1451 = vmatprep.subr.mxu0 0.0
          %1452 = vmatpush1.msra.mxu0 0.0
          %1453 = vmatprep.subr.mxu0 0.0
          %1454 = vmatpush1.msra.mxu0 0.0
          %1455 = vmatprep.subr.mxu0 0.0
          %v1456 = vand.u32 %v1170, 4294901760
          %1457 = vmatpush1.msra.mxu0 %v1456
          %1458 = vmatprep.subr.mxu0 0.0
          %v1459 = vand.u32 %v1169, 4294901760
          %1460 = vmatpush1.msra.mxu0 %v1459
          %1461 = vmatprep.subr.mxu0 0.0
          %v1462 = vand.u32 %v1168, 4294901760
          %1463 = vmatpush1.msra.mxu0 %v1462
          %1464 = vmatprep.subr.mxu0 0.0
          %v1465 = vand.u32 %v1167, 4294901760
          %1466 = vmatpush1.msra.mxu0 %v1465
          %1467 = vmatprep.subr.mxu0 0.0
          %1468 = vmatpush2.msra.mxu0 0.0
          %1469 = vmatprep.subr.mxu0 0.0
          %1470 = vmatpush2.msra.mxu0 0.0
          %1471 = vmatprep.subr.mxu0 0.0
          %1472 = vmatpush2.msra.mxu0 0.0
          %1473 = vmatprep.subr.mxu0 0.0
          %1474 = vmatpush2.msra.mxu0 0.0
          %1475 = vmatprep.subr.mxu0 0.0
          %1476 = vmatpush2.msra.mxu0 0.0
          %1477 = vmatprep.subr.mxu0 0.0
          %1478 = vmatpush2.msra.mxu0 0.0
          %1479 = vmatprep.subr.mxu0 0.0
          %1480 = vmatpush2.msra.mxu0 0.0
          %1481 = vmatprep.subr.mxu0 0.0
          %1482 = vmatpush2.msra.mxu0 0.0
          %1483 = vmatprep.subr.mxu0 0.0
          %1484 = vmatpush2.msra.mxu0 0.0
          %1485 = vmatprep.subr.mxu0 0.0
          %1486 = vmatpush2.msra.mxu0 0.0
          %1487 = vmatprep.subr.mxu0 0.0
          %1488 = vmatpush2.msra.mxu0 0.0
          %1489 = vmatprep.subr.mxu0 0.0
          %1490 = vmatpush2.msra.mxu0 0.0
          %1491 = vmatprep.subr.mxu0 0.0
          %1492 = vmatpush2.msra.mxu0 0.0
          %1493 = vmatprep.subr.mxu0 0.0
          %1494 = vmatpush2.msra.mxu0 0.0
          %1495 = vmatprep.subr.mxu0 0.0
          %1496 = vmatpush2.msra.mxu0 0.0
          %1497 = vmatprep.subr.mxu0 0.0
          %1498 = vmatpush2.msra.mxu0 0.0
          %1499 = vmatprep.mubr.f32.mxu0 0.0
          %v1500 = vand.u32 %v1179, 4294901760
          %v1501 = vsub.f32 %v1179, %v1500
          %v1502 = vand.u32 %v1501, 4294901760
          %1503 = vmatmul.mubr.f32.gmra.mxu0 %v1502
          %v1504 = vpop.f32.mrf.mxu0
          %v1505 = vadd.f32 %v1428, %v1504
          %v1506 = vpop.f32.mrf.mxu0
          %1507 = vdwg.mxu0
          %1508 = vmatprep.subr.mxu0 0.0
          %1509 = vmatpush1.msra.mxu0 0.0
          %1510 = vmatprep.subr.mxu0 0.0
          %1511 = vmatpush1.msra.mxu0 0.0
          %1512 = vmatprep.subr.mxu0 0.0
          %1513 = vmatpush1.msra.mxu0 0.0
          %1514 = vmatprep.subr.mxu0 0.0
          %1515 = vmatpush1.msra.mxu0 0.0
          %1516 = vmatprep.subr.mxu0 0.0
          %1517 = vmatpush1.msra.mxu0 0.0
          %1518 = vmatprep.subr.mxu0 0.0
          %1519 = vmatpush1.msra.mxu0 0.0
          %1520 = vmatprep.subr.mxu0 0.0
          %1521 = vmatpush1.msra.mxu0 0.0
          %1522 = vmatprep.subr.mxu0 0.0
          %1523 = vmatpush1.msra.mxu0 0.0
          %1524 = vmatprep.subr.mxu0 0.0
          %1525 = vmatpush1.msra.mxu0 0.0
          %1526 = vmatprep.subr.mxu0 0.0
          %1527 = vmatpush1.msra.mxu0 0.0
          %1528 = vmatprep.subr.mxu0 0.0
          %1529 = vmatpush1.msra.mxu0 0.0
          %1530 = vmatprep.subr.mxu0 0.0
          %1531 = vmatpush1.msra.mxu0 0.0
          %1532 = vmatprep.subr.mxu0 0.0
          %v1533 = vand.u32 %v1170, 4294901760
          %v1534 = vsub.f32 %v1170, %v1533
          %v1535 = vand.u32 %v1534, 4294901760
          %1536 = vmatpush1.msra.mxu0 %v1535
          %1537 = vmatprep.subr.mxu0 0.0
          %v1538 = vand.u32 %v1169, 4294901760
          %v1539 = vsub.f32 %v1169, %v1538
          %v1540 = vand.u32 %v1539, 4294901760
          %1541 = vmatpush1.msra.mxu0 %v1540
          %1542 = vmatprep.subr.mxu0 0.0
          %v1543 = vand.u32 %v1168, 4294901760
          %v1544 = vsub.f32 %v1168, %v1543
          %v1545 = vand.u32 %v1544, 4294901760
          %1546 = vmatpush1.msra.mxu0 %v1545
          %1547 = vmatprep.subr.mxu0 0.0
          %v1548 = vand.u32 %v1167, 4294901760
          %v1549 = vsub.f32 %v1167, %v1548
          %v1550 = vand.u32 %v1549, 4294901760
          %1551 = vmatpush1.msra.mxu0 %v1550
          %1552 = vmatprep.subr.mxu0 0.0
          %1553 = vmatpush2.msra.mxu0 0.0
          %1554 = vmatprep.subr.mxu0 0.0
          %1555 = vmatpush2.msra.mxu0 0.0
          %1556 = vmatprep.subr.mxu0 0.0
          %1557 = vmatpush2.msra.mxu0 0.0
          %1558 = vmatprep.subr.mxu0 0.0
          %1559 = vmatpush2.msra.mxu0 0.0
          %1560 = vmatprep.subr.mxu0 0.0
          %1561 = vmatpush2.msra.mxu0 0.0
          %1562 = vmatprep.subr.mxu0 0.0
          %1563 = vmatpush2.msra.mxu0 0.0
          %1564 = vmatprep.subr.mxu0 0.0
          %1565 = vmatpush2.msra.mxu0 0.0
          %1566 = vmatprep.subr.mxu0 0.0
          %1567 = vmatpush2.msra.mxu0 0.0
          %1568 = vmatprep.subr.mxu0 0.0
          %1569 = vmatpush2.msra.mxu0 0.0
          %1570 = vmatprep.subr.mxu0 0.0
          %1571 = vmatpush2.msra.mxu0 0.0
          %1572 = vmatprep.subr.mxu0 0.0
          %1573 = vmatpush2.msra.mxu0 0.0
          %1574 = vmatprep.subr.mxu0 0.0
          %1575 = vmatpush2.msra.mxu0 0.0
          %1576 = vmatprep.subr.mxu0 0.0
          %1577 = vmatpush2.msra.mxu0 0.0
          %1578 = vmatprep.subr.mxu0 0.0
          %1579 = vmatpush2.msra.mxu0 0.0
          %1580 = vmatprep.subr.mxu0 0.0
          %1581 = vmatpush2.msra.mxu0 0.0
          %1582 = vmatprep.subr.mxu0 0.0
          %1583 = vmatpush2.msra.mxu0 0.0
          %1584 = vmatprep.mubr.f32.mxu0 0.0
          %v1585 = vand.u32 %v1179, 4294901760
          %1586 = vmatmul.mubr.f32.gmra.mxu0 %v1585
          %v1587 = vpop.f32.mrf.mxu0
          %v1588 = vadd.f32 %v1505, %v1587
          %v1589 = vpop.f32.mrf.mxu0
          %1590 = vdwg.mxu0
          %1591 = vmatprep.subr.mxu0 0.0
          %1592 = vmatpush1.msra.mxu0 0.0
          %1593 = vmatprep.subr.mxu0 0.0
          %1594 = vmatpush1.msra.mxu0 0.0
          %1595 = vmatprep.subr.mxu0 0.0
          %1596 = vmatpush1.msra.mxu0 0.0
          %1597 = vmatprep.subr.mxu0 0.0
          %1598 = vmatpush1.msra.mxu0 0.0
          %1599 = vmatprep.subr.mxu0 0.0
          %1600 = vmatpush1.msra.mxu0 0.0
          %1601 = vmatprep.subr.mxu0 0.0
          %1602 = vmatpush1.msra.mxu0 0.0
          %1603 = vmatprep.subr.mxu0 0.0
          %1604 = vmatpush1.msra.mxu0 0.0
          %1605 = vmatprep.subr.mxu0 0.0
          %1606 = vmatpush1.msra.mxu0 0.0
          %1607 = vmatprep.subr.mxu0 0.0
          %1608 = vmatpush1.msra.mxu0 0.0
          %1609 = vmatprep.subr.mxu0 0.0
          %1610 = vmatpush1.msra.mxu0 0.0
          %1611 = vmatprep.subr.mxu0 0.0
          %1612 = vmatpush1.msra.mxu0 0.0
          %1613 = vmatprep.subr.mxu0 0.0
          %1614 = vmatpush1.msra.mxu0 0.0
          %1615 = vmatprep.subr.mxu0 0.0
          %v1616 = vand.u32 %v1170, 4294901760
          %1617 = vmatpush1.msra.mxu0 %v1616
          %1618 = vmatprep.subr.mxu0 0.0
          %v1619 = vand.u32 %v1169, 4294901760
          %1620 = vmatpush1.msra.mxu0 %v1619
          %1621 = vmatprep.subr.mxu0 0.0
          %v1622 = vand.u32 %v1168, 4294901760
          %1623 = vmatpush1.msra.mxu0 %v1622
          %1624 = vmatprep.subr.mxu0 0.0
          %v1625 = vand.u32 %v1167, 4294901760
          %1626 = vmatpush1.msra.mxu0 %v1625
          %1627 = vmatprep.subr.mxu0 0.0
          %1628 = vmatpush2.msra.mxu0 0.0
          %1629 = vmatprep.subr.mxu0 0.0
          %1630 = vmatpush2.msra.mxu0 0.0
          %1631 = vmatprep.subr.mxu0 0.0
          %1632 = vmatpush2.msra.mxu0 0.0
          %1633 = vmatprep.subr.mxu0 0.0
          %1634 = vmatpush2.msra.mxu0 0.0
          %1635 = vmatprep.subr.mxu0 0.0
          %1636 = vmatpush2.msra.mxu0 0.0
          %1637 = vmatprep.subr.mxu0 0.0
          %1638 = vmatpush2.msra.mxu0 0.0
          %1639 = vmatprep.subr.mxu0 0.0
          %1640 = vmatpush2.msra.mxu0 0.0
          %1641 = vmatprep.subr.mxu0 0.0
          %1642 = vmatpush2.msra.mxu0 0.0
          %1643 = vmatprep.subr.mxu0 0.0
          %1644 = vmatpush2.msra.mxu0 0.0
          %1645 = vmatprep.subr.mxu0 0.0
          %1646 = vmatpush2.msra.mxu0 0.0
          %1647 = vmatprep.subr.mxu0 0.0
          %1648 = vmatpush2.msra.mxu0 0.0
          %1649 = vmatprep.subr.mxu0 0.0
          %1650 = vmatpush2.msra.mxu0 0.0
          %1651 = vmatprep.subr.mxu0 0.0
          %1652 = vmatpush2.msra.mxu0 0.0
          %1653 = vmatprep.subr.mxu0 0.0
          %1654 = vmatpush2.msra.mxu0 0.0
          %1655 = vmatprep.subr.mxu0 0.0
          %1656 = vmatpush2.msra.mxu0 0.0
          %1657 = vmatprep.subr.mxu0 0.0
          %1658 = vmatpush2.msra.mxu0 0.0
          %1659 = vmatprep.mubr.f32.mxu0 0.0
          %v1660 = vand.u32 %v1179, 4294901760
          %1661 = vmatmul.mubr.f32.gmra.mxu0 %v1660
          %v1662 = vpop.f32.mrf.mxu0
          %v1663 = vadd.f32 %v1588, %v1662
          %v1664 = vpop.f32.mrf.mxu0
          %1665 = vdwg.mxu0
          %v1666 = vsel %vm1159, %v1166, 0.0
          %v1667 = vrot.slane %v1666, 4
          %v1668 = vadd.f32 %v1666, %v1667
          %v1669 = vrot.slane %v1668, 2
          %v1670 = vadd.f32 %v1668, %v1669
          %v1671 = vrot.slane %v1670, 1
          %v1672 = vadd.f32 %v1670, %v1671
          %v1673 = vrcp.pop 8.0
          %v1674 = vmul.f32 %v1672, %v1673
          %v1675 = vsub.f32 %v1166, %v1674
          %v1676 = vmul.f32 %v1675, %v1675
          %v1677 = vsel %vm1159, %v1676, 0.0
          %v1678 = vrot.slane %v1677, 4
          %v1679 = vadd.f32 %v1677, %v1678
          %v1680 = vrot.slane %v1679, 2
          %v1681 = vadd.f32 %v1679, %v1680
          %v1682 = vrot.slane %v1681, 1
          %v1683 = vadd.f32 %v1681, %v1682
          %v1684 = vmul.f32 %v1683, %v1673
          %v1685 = vadd.f32 %v1684, 1e-05
          %v1686 = vrsqrt.pop %v1685
          %v1687 = vld [vmem:[%s5] sm:$0x1]
          %v1688 = vmul.f32 %v1686, %v1687
          %v1689 = vld [vmem:[%s6] sm:$0x1]
          %v1690 = vmul.f32 %v1674, %v1688
          %v1691 = vsub.f32 %v1689, %v1690
          %v1692 = vlaneseq
          %v1693 = vshrl.u32 %v1692, 7
          %v1694 = vsub.s32 0, %v1693
          %v1695 = vrot.slane %v1688, %v1694
          %v1696 = vmul.f32 %v1166, %v1695
          %v1698 = vlaneseq
          %v1699 = vshrl.u32 %v1698, 7
          %v1700 = vsub.s32 0, %v1699
          %v1701 = vrot.slane %v1691, %v1700
          %v1703 = vadd.f32 %v1696, %v1701
          %vm1704 = vcmask 80896
          %1705 = vst.msk [vmem:[#allocation4] sm:$0xff] %vm1704, %v1663
          %1706 = vrot.lane.b32.xlu0 %v1166, 10
          %v1707 = vpop.permute.xlu0 %1706
          %vm1709 = vcmask 343120
          %1710 = vst.msk [vmem:[#allocation4] sm:$0xff] %vm1709, %v1707
          %1712 = vrot.lane.b32.xlu0 %v1703, 42
          %v1713 = vpop.permute.xlu0 %1712
          %vm1715 = vcmask 605520
          %1716 = vst.msk [vmem:[#allocation4] sm:$0xff] %vm1715, %v1713
          %vm1717 = vcmask 1048144
          %1718 = vst.msk [vmem:[#allocation4] sm:$0xff] %vm1717, 0.0
        $region97: #{tpu_custom_call.1} parent=84 // pred_fallthru
          _
        // Predicated region
        $region98: #{tpu_custom_call.1} parent=84 // pred_check
          %p1719 = pneg %p184
        $region99: #{tpu_custom_call.1} parent=84 // pred_check_branch
          %1721 = sbr.rel (%p1719) target = $region101
        $region100: #{tpu_custom_call.1} parent=84 // pred_region
          %s1723 = ssub.s32 128, 128
          %1724 = vsyncadd [#allocation5], %s1723
          %s1726 = sshll.u32 [#allocation4], 4
          %s1727 = int_to_ptr.vmem [resolvable:$true] %s1726
          %1729 = dma.vmem_to_hbm [thread:$0]  %s1727, 128, %s7, [#allocation5]
        $region101: #{tpu_custom_call.1} parent=84 // pred_fallthru
          _
        // Predicated region
        $region102: #{tpu_custom_call.1} parent=84 // pred_check
          %p1730 = pneg %p184
        $region103: #{tpu_custom_call.1} parent=84 // pred_check_branch
          %1732 = sbr.rel (%p1730) target = $region105
        $region104: #{tpu_custom_call.1} parent=84 // pred_region
          %1733 = dma.done [#allocation5], 128
        $region105: #{tpu_custom_call.1} parent=84 // pred_fallthru
          _
      $region85: #{tpu_custom_call.1} parent=5 // pred_fallthru
        _
      %p1734 = scmp.le.s32.totalorder 2, %s14
      // Predicated region
      $region106: #{tpu_custom_call.1} parent=5 // pred_check
        %p1735 = pneg %p1734
      $region107: #{tpu_custom_call.1} parent=5 // pred_check_branch
        %1737 = sbr.rel (%p1735) target = $region109
      $region108: #{tpu_custom_call.1} parent=5 // pred_region
        %s1738 = ssub.s32 %s14, 2
      $region109: #{tpu_custom_call.1} parent=5 // pred_fallthru
        _
    $region6: #{tpu_custom_call.1} parent=1 // loop_footer
      %s18 = sadd.s32 1, %s14
    $region7: #{tpu_custom_call.1} parent=1 // loop_footer_branch
      %13 = sbr.rel target = $region3
    $region8: #{tpu_custom_call.1} parent=1 // loop_exit
      _
    %1739 = vsyncpa [#allocation5], 1
    %s1740 = scalar_lea.sflag [#allocation5], 1
    %1741 = vsyncpa %s1740, 1

</llo_original>
